<compile_context>
chip_gen: v7x
topology: tpu7x:2x2x1
jax: 0.10.0
libtpu: 0.0.40
codegen_flags: <defaults>
</compile_context>

<pallas_src>
import jax
import jax.numpy as jnp
from jax.experimental import pallas as pl
from jax.experimental.pallas import tpu as pltpu


def poetry_lm_kernel(x_ref, wih_ref, whh_ref, b_ref, wout_ref, bout_ref,
                     mask_ref, out_ref, hn_ref, cn_ref):
    """Single-invocation kernel: LSTM over time + Linear + ReLU + LogSoftmax."""
    H = x_ref.shape[0]
    hid = whh_ref.shape[0]

    # Hoisted input projection: one batched MXU matmul + bias for all steps,
    # kept as a value (no VMEM scratch round trip).
    xp = (jnp.dot(x_ref[...], wih_ref[...],
                  preferred_element_type=jnp.float32)
          + b_ref[...])                                               # [H, 4*hid]
    whh = whh_ref[...]                                                # [hid, 4*hid]

    # hidden=None in PyTorch -> zero initial states, carried as vreg values.
    h = jnp.zeros((1, hid), jnp.float32)
    c = jnp.zeros((1, hid), jnp.float32)
    hs = jnp.zeros((H, hid), jnp.float32)
    row_ids = jax.lax.broadcasted_iota(jnp.int32, (H, hid), 0)

    # H is static & small: plain Python unroll, all indices concrete, so the
    # LLO scheduler can overlap cross-step work with MXU/EUP latency.
    for t in range(H):
        # Per-step critical path: one [1,hid]x[hid,4*hid] MXU matmul.
        gates = xp[t:t + 1, :] + jnp.dot(h, whh,
                                         preferred_element_type=jnp.float32)
        # Two full-width EUP ops instead of four quarter-width ones.
        sig_all = jax.nn.sigmoid(gates)
        tanh_all = jnp.tanh(gates)
        i = sig_all[:, 0 * hid:1 * hid]
        f = sig_all[:, 1 * hid:2 * hid]
        g = tanh_all[:, 2 * hid:3 * hid]
        o = sig_all[:, 3 * hid:4 * hid]
        c = f * c + i * g
        h = o * jnp.tanh(c)
        # Row select (VPU) is off the serial recurrence chain.
        hs = jnp.where(row_ids == t, h, hs)

    # Epilogue: Linear (lane-padded vocab) -> ReLU -> masked log-softmax.
    z = (jnp.dot(hs, wout_ref[...], preferred_element_type=jnp.float32)
         + bout_ref[...])                                             # [H, Vp]
    # Additive pad mask (0 valid / -inf pad) applied after ReLU so pad lanes
    # vanish from the max / logsumexp.
    z = jnp.maximum(z, 0.0) + mask_ref[...]
    m = jnp.max(z, axis=-1, keepdims=True)
    lse = jnp.log(jnp.sum(jnp.exp(z - m), axis=-1, keepdims=True))
    out_ref[...] = (z - m) - lse
    hn_ref[...] = h
    cn_ref[...] = c


def poetry_lm_forward(seq_input, params):
    """Wrapper: embedding gather (glue) + Pallas kernel for the rest."""
    emb, w_ih, w_hh, b_ih, b_hh, w_out, b_out = (
        params["emb"], params["w_ih"], params["w_hh"],
        params["b_ih"], params["b_hh"], params["w_out"], params["b_out"])

    H = seq_input.shape[0]
    hid = w_hh.shape[1]
    vocab = w_out.shape[0]

    LANE = 128
    Vp = ((vocab + LANE - 1) // LANE) * LANE       # lane-dense epilogue output

    x_embed = emb[seq_input]                       # [H, E]  (gather = glue)
    wih_t = w_ih.T                                 # [E, 4*hid]
    whh_t = w_hh.T                                 # [hid, 4*hid]
    b = (b_ih + b_hh)[None, :]                     # [1, 4*hid]
    wout_p = jnp.zeros((hid, Vp), jnp.float32).at[:, :vocab].set(w_out.T)
    bout_p = jnp.zeros((1, Vp), jnp.float32).at[:, :vocab].set(b_out[None, :])
    if Vp == vocab:                                # no pad lanes -> no-op mask
        pad_mask = jnp.zeros((1, Vp), jnp.float32)
    else:                                          # 0 valid / -inf pad
        pad_mask = jnp.where(jnp.arange(Vp) < vocab, 0.0,
                             -jnp.inf).astype(jnp.float32)[None, :]

    vmem = pl.BlockSpec(memory_space=pltpu.MemorySpace.VMEM)
    out_p, h_n, c_n = pl.pallas_call(
        poetry_lm_kernel,
        out_shape=(
            jax.ShapeDtypeStruct((H, Vp), jnp.float32),
            jax.ShapeDtypeStruct((1, hid), jnp.float32),
            jax.ShapeDtypeStruct((1, hid), jnp.float32),
        ),
        in_specs=[vmem] * 7,
        out_specs=(vmem, vmem, vmem),
    )(x_embed, wih_t, whh_t, b, wout_p, bout_p, pad_mask)

    # Note: pad lanes of out_p hold -inf by construction; sliced off here.
    out = out_p[:, :vocab]
    # Match PyTorch hidden shapes: [num_layers=1, batch=1, hid]
    return out, (h_n.reshape(1, 1, hid), c_n.reshape(1, 1, hid))


def reference_forward(seq_input, params):
    """Pure-JAX reference mirroring the PyTorch module, for verification."""
    emb, w_ih, w_hh, b_ih, b_hh, w_out, b_out = (
        params["emb"], params["w_ih"], params["w_hh"],
        params["b_ih"], params["b_hh"], params["w_out"], params["b_out"])
    hid = w_hh.shape[1]
    x = emb[seq_input]

    def step(carry, x_t):
        h, c = carry
        gates = x_t @ w_ih.T + b_ih + h @ w_hh.T + b_hh
        i, f, g, o = jnp.split(gates, 4)
        i, f, o = jax.nn.sigmoid(i), jax.nn.sigmoid(f), jax.nn.sigmoid(o)
        g = jnp.tanh(g)
        c = f * c + i * g
        h = o * jnp.tanh(c)
        return (h, c), h

    (h, c), hs = jax.lax.scan(step, (jnp.zeros(hid), jnp.zeros(hid)), x)
    z = jnp.maximum(hs @ w_out.T + b_out, 0.0)
    return jax.nn.log_softmax(z, axis=-1), h, c


def init_params(key, vocab_size, embedding_dim, hidden_dim):
    ks = jax.random.split(key, 7)
    s = 0.1
    return {
        "emb":   jax.random.normal(ks[0], (vocab_size, embedding_dim), jnp.float32),
        "w_ih":  s * jax.random.normal(ks[1], (4 * hidden_dim, embedding_dim), jnp.float32),
        "w_hh":  s * jax.random.normal(ks[2], (4 * hidden_dim, hidden_dim), jnp.float32),
        "b_ih":  s * jax.random.normal(ks[3], (4 * hidden_dim,), jnp.float32),
        "b_hh":  s * jax.random.normal(ks[4], (4 * hidden_dim,), jnp.float32),
        "w_out": s * jax.random.normal(ks[5], (vocab_size, hidden_dim), jnp.float32),
        "b_out": s * jax.random.normal(ks[6], (vocab_size,), jnp.float32),
    }


if __name__ == "__main__":
    vocab_size, embedding_dim, hidden_dim, seq_len = 32, 16, 32, 8

    key = jax.random.PRNGKey(0)
    k_param, k_seq = jax.random.split(key)
    params = init_params(k_param, vocab_size, embedding_dim, hidden_dim)
    seq_input = jax.random.randint(k_seq, (seq_len,), 0, vocab_size, dtype=jnp.int32)

    out, (h_n, c_n) = poetry_lm_forward(seq_input, params)
    jax.block_until_ready((out, h_n, c_n))

    ref_out, ref_h, ref_c = reference_forward(seq_input, params)
    assert out.shape == (seq_len, vocab_size)
    assert h_n.shape == (1, 1, hidden_dim) and c_n.shape == (1, 1, hidden_dim)
    assert jnp.allclose(out, ref_out, atol=1e-4, rtol=1e-4)
    assert jnp.allclose(h_n.reshape(-1), ref_h, atol=1e-4, rtol=1e-4)
    assert jnp.allclose(c_n.reshape(-1), ref_c, atol=1e-4, rtol=1e-4)

    print("KERNEL_OK")
</pallas_src>

<mosaic_0001>
module attributes {stable_mosaic.version = 11 : i64} {
  func.func @poetry_lm_kernel(%arg0: memref<8x16xf32, #tpu.memory_space<vmem>>, %arg1: memref<16x128xf32, #tpu.memory_space<vmem>>, %arg2: memref<32x128xf32, #tpu.memory_space<vmem>>, %arg3: memref<1x128xf32, #tpu.memory_space<vmem>>, %arg4: memref<32x128xf32, #tpu.memory_space<vmem>>, %arg5: memref<1x128xf32, #tpu.memory_space<vmem>>, %arg6: memref<1x128xf32, #tpu.memory_space<vmem>>, %arg7: memref<8x128xf32, #tpu.memory_space<vmem>>, %arg8: memref<1x32xf32, #tpu.memory_space<vmem>>, %arg9: memref<1x32xf32, #tpu.memory_space<vmem>>) attributes {dimension_semantics = [], scalar_prefetch = 0 : i64, scratch_operands = 0 : i64, tpu.core_type = #tpu.core_type<tc>} {
    %c0 = arith.constant 0 : index
    %c0_0 = arith.constant 0 : index
    %0 = vector.load %arg0[%c0, %c0_0] : memref<8x16xf32, #tpu.memory_space<vmem>>, vector<8x16xf32>
    %c0_1 = arith.constant 0 : index
    %c0_2 = arith.constant 0 : index
    %1 = vector.load %arg1[%c0_1, %c0_2] : memref<16x128xf32, #tpu.memory_space<vmem>>, vector<16x128xf32>
    %cst = arith.constant dense<0.000000e+00> : vector<8x128xf32>
    %2 = tpu.matmul %0, %1, %cst {dimension_numbers = #tpu.dot_dimension_numbers<[1], [0], [0], [1], [0, 0, 1, 1], [], []>} : vector<8x16xf32>, vector<16x128xf32>, vector<8x128xf32> -> vector<8x128xf32>
    %c0_3 = arith.constant 0 : index
    %c0_4 = arith.constant 0 : index
    %3 = vector.load %arg3[%c0_3, %c0_4] : memref<1x128xf32, #tpu.memory_space<vmem>>, vector<1x128xf32>
    %4 = vector.broadcast %3 : vector<1x128xf32> to vector<8x128xf32>
    %5 = arith.addf %2, %4 : vector<8x128xf32>
    %c0_5 = arith.constant 0 : index
    %c0_6 = arith.constant 0 : index
    %6 = vector.load %arg2[%c0_5, %c0_6] : memref<32x128xf32, #tpu.memory_space<vmem>>, vector<32x128xf32>
    %cst_7 = arith.constant 0.000000e+00 : f32
    %7 = vector.broadcast %cst_7 : f32 to vector<1x32xf32>
    %cst_8 = arith.constant 0.000000e+00 : f32
    %8 = vector.broadcast %cst_8 : f32 to vector<1x32xf32>
    %cst_9 = arith.constant 0.000000e+00 : f32
    %9 = vector.broadcast %cst_9 : f32 to vector<8x32xf32>
    %10 = tpu.iota {dimensions = array<i32: 0>} : vector<8x32xi32>
    %11 = vector.extract_strided_slice %5 {offsets = [0, 0], sizes = [1, 128], strides = [1, 1]} : vector<8x128xf32> to vector<1x128xf32>
    %cst_10 = arith.constant dense<0.000000e+00> : vector<1x128xf32>
    %12 = tpu.matmul %7, %6, %cst_10 {dimension_numbers = #tpu.dot_dimension_numbers<[1], [0], [0], [1], [0, 0, 1, 1], [], []>} : vector<1x32xf32>, vector<32x128xf32>, vector<1x128xf32> -> vector<1x128xf32>
    %13 = arith.addf %11, %12 : vector<1x128xf32>
    %14 = arith.negf %13 : vector<1x128xf32>
    %15 = math.exp %14 : vector<1x128xf32>
    %cst_11 = arith.constant 1.000000e+00 : f32
    %16 = vector.broadcast %cst_11 : f32 to vector<1x128xf32>
    %17 = arith.addf %16, %15 : vector<1x128xf32>
    %18 = arith.divf %16, %17 : vector<1x128xf32>
    %19 = math.tanh %13 : vector<1x128xf32>
    %20 = vector.extract_strided_slice %18 {offsets = [0, 0], sizes = [1, 32], strides = [1, 1]} : vector<1x128xf32> to vector<1x32xf32>
    %21 = vector.extract_strided_slice %18 {offsets = [0, 32], sizes = [1, 32], strides = [1, 1]} : vector<1x128xf32> to vector<1x32xf32>
    %22 = vector.extract_strided_slice %19 {offsets = [0, 64], sizes = [1, 32], strides = [1, 1]} : vector<1x128xf32> to vector<1x32xf32>
    %23 = vector.extract_strided_slice %18 {offsets = [0, 96], sizes = [1, 32], strides = [1, 1]} : vector<1x128xf32> to vector<1x32xf32>
    %24 = arith.mulf %21, %8 : vector<1x32xf32>
    %25 = arith.mulf %20, %22 : vector<1x32xf32>
    %26 = arith.addf %24, %25 : vector<1x32xf32>
    %27 = math.tanh %26 : vector<1x32xf32>
    %28 = arith.mulf %23, %27 : vector<1x32xf32>
    %c0_i32 = arith.constant 0 : i32
    %29 = vector.broadcast %c0_i32 : i32 to vector<8x32xi32>
    %30 = arith.cmpi eq, %10, %29 : vector<8x32xi32>
    %31 = vector.shape_cast %28 : vector<1x32xf32> to vector<1x32xf32>
    %32 = vector.broadcast %31 : vector<1x32xf32> to vector<8x32xf32>
    %33 = arith.select %30, %32, %9 : vector<8x32xi1>, vector<8x32xf32>
    %34 = vector.extract_strided_slice %5 {offsets = [1, 0], sizes = [1, 128], strides = [1, 1]} : vector<8x128xf32> to vector<1x128xf32>
    %cst_12 = arith.constant dense<0.000000e+00> : vector<1x128xf32>
    %35 = tpu.matmul %28, %6, %cst_12 {dimension_numbers = #tpu.dot_dimension_numbers<[1], [0], [0], [1], [0, 0, 1, 1], [], []>} : vector<1x32xf32>, vector<32x128xf32>, vector<1x128xf32> -> vector<1x128xf32>
    %36 = arith.addf %34, %35 : vector<1x128xf32>
    %37 = arith.negf %36 : vector<1x128xf32>
    %38 = math.exp %37 : vector<1x128xf32>
    %cst_13 = arith.constant 1.000000e+00 : f32
    %39 = vector.broadcast %cst_13 : f32 to vector<1x128xf32>
    %40 = arith.addf %39, %38 : vector<1x128xf32>
    %41 = arith.divf %39, %40 : vector<1x128xf32>
    %42 = math.tanh %36 : vector<1x128xf32>
    %43 = vector.extract_strided_slice %41 {offsets = [0, 0], sizes = [1, 32], strides = [1, 1]} : vector<1x128xf32> to vector<1x32xf32>
    %44 = vector.extract_strided_slice %41 {offsets = [0, 32], sizes = [1, 32], strides = [1, 1]} : vector<1x128xf32> to vector<1x32xf32>
    %45 = vector.extract_strided_slice %42 {offsets = [0, 64], sizes = [1, 32], strides = [1, 1]} : vector<1x128xf32> to vector<1x32xf32>
    %46 = vector.extract_strided_slice %41 {offsets = [0, 96], sizes = [1, 32], strides = [1, 1]} : vector<1x128xf32> to vector<1x32xf32>
    %47 = arith.mulf %44, %26 : vector<1x32xf32>
    %48 = arith.mulf %43, %45 : vector<1x32xf32>
    %49 = arith.addf %47, %48 : vector<1x32xf32>
    %50 = math.tanh %49 : vector<1x32xf32>
    %51 = arith.mulf %46, %50 : vector<1x32xf32>
    %c1_i32 = arith.constant 1 : i32
    %52 = vector.broadcast %c1_i32 : i32 to vector<8x32xi32>
    %53 = arith.cmpi eq, %10, %52 : vector<8x32xi32>
    %54 = vector.shape_cast %51 : vector<1x32xf32> to vector<1x32xf32>
    %55 = vector.broadcast %54 : vector<1x32xf32> to vector<8x32xf32>
    %56 = arith.select %53, %55, %33 : vector<8x32xi1>, vector<8x32xf32>
    %57 = vector.extract_strided_slice %5 {offsets = [2, 0], sizes = [1, 128], strides = [1, 1]} : vector<8x128xf32> to vector<1x128xf32>
    %cst_14 = arith.constant dense<0.000000e+00> : vector<1x128xf32>
    %58 = tpu.matmul %51, %6, %cst_14 {dimension_numbers = #tpu.dot_dimension_numbers<[1], [0], [0], [1], [0, 0, 1, 1], [], []>} : vector<1x32xf32>, vector<32x128xf32>, vector<1x128xf32> -> vector<1x128xf32>
    %59 = arith.addf %57, %58 : vector<1x128xf32>
    %60 = arith.negf %59 : vector<1x128xf32>
    %61 = math.exp %60 : vector<1x128xf32>
    %cst_15 = arith.constant 1.000000e+00 : f32
    %62 = vector.broadcast %cst_15 : f32 to vector<1x128xf32>
    %63 = arith.addf %62, %61 : vector<1x128xf32>
    %64 = arith.divf %62, %63 : vector<1x128xf32>
    %65 = math.tanh %59 : vector<1x128xf32>
    %66 = vector.extract_strided_slice %64 {offsets = [0, 0], sizes = [1, 32], strides = [1, 1]} : vector<1x128xf32> to vector<1x32xf32>
    %67 = vector.extract_strided_slice %64 {offsets = [0, 32], sizes = [1, 32], strides = [1, 1]} : vector<1x128xf32> to vector<1x32xf32>
    %68 = vector.extract_strided_slice %65 {offsets = [0, 64], sizes = [1, 32], strides = [1, 1]} : vector<1x128xf32> to vector<1x32xf32>
    %69 = vector.extract_strided_slice %64 {offsets = [0, 96], sizes = [1, 32], strides = [1, 1]} : vector<1x128xf32> to vector<1x32xf32>
    %70 = arith.mulf %67, %49 : vector<1x32xf32>
    %71 = arith.mulf %66, %68 : vector<1x32xf32>
    %72 = arith.addf %70, %71 : vector<1x32xf32>
    %73 = math.tanh %72 : vector<1x32xf32>
    %74 = arith.mulf %69, %73 : vector<1x32xf32>
    %c2_i32 = arith.constant 2 : i32
    %75 = vector.broadcast %c2_i32 : i32 to vector<8x32xi32>
    %76 = arith.cmpi eq, %10, %75 : vector<8x32xi32>
    %77 = vector.shape_cast %74 : vector<1x32xf32> to vector<1x32xf32>
    %78 = vector.broadcast %77 : vector<1x32xf32> to vector<8x32xf32>
    %79 = arith.select %76, %78, %56 : vector<8x32xi1>, vector<8x32xf32>
    %80 = vector.extract_strided_slice %5 {offsets = [3, 0], sizes = [1, 128], strides = [1, 1]} : vector<8x128xf32> to vector<1x128xf32>
    %cst_16 = arith.constant dense<0.000000e+00> : vector<1x128xf32>
    %81 = tpu.matmul %74, %6, %cst_16 {dimension_numbers = #tpu.dot_dimension_numbers<[1], [0], [0], [1], [0, 0, 1, 1], [], []>} : vector<1x32xf32>, vector<32x128xf32>, vector<1x128xf32> -> vector<1x128xf32>
    %82 = arith.addf %80, %81 : vector<1x128xf32>
    %83 = arith.negf %82 : vector<1x128xf32>
    %84 = math.exp %83 : vector<1x128xf32>
    %cst_17 = arith.constant 1.000000e+00 : f32
    %85 = vector.broadcast %cst_17 : f32 to vector<1x128xf32>
    %86 = arith.addf %85, %84 : vector<1x128xf32>
    %87 = arith.divf %85, %86 : vector<1x128xf32>
    %88 = math.tanh %82 : vector<1x128xf32>
    %89 = vector.extract_strided_slice %87 {offsets = [0, 0], sizes = [1, 32], strides = [1, 1]} : vector<1x128xf32> to vector<1x32xf32>
    %90 = vector.extract_strided_slice %87 {offsets = [0, 32], sizes = [1, 32], strides = [1, 1]} : vector<1x128xf32> to vector<1x32xf32>
    %91 = vector.extract_strided_slice %88 {offsets = [0, 64], sizes = [1, 32], strides = [1, 1]} : vector<1x128xf32> to vector<1x32xf32>
    %92 = vector.extract_strided_slice %87 {offsets = [0, 96], sizes = [1, 32], strides = [1, 1]} : vector<1x128xf32> to vector<1x32xf32>
    %93 = arith.mulf %90, %72 : vector<1x32xf32>
    %94 = arith.mulf %89, %91 : vector<1x32xf32>
    %95 = arith.addf %93, %94 : vector<1x32xf32>
    %96 = math.tanh %95 : vector<1x32xf32>
    %97 = arith.mulf %92, %96 : vector<1x32xf32>
    %c3_i32 = arith.constant 3 : i32
    %98 = vector.broadcast %c3_i32 : i32 to vector<8x32xi32>
    %99 = arith.cmpi eq, %10, %98 : vector<8x32xi32>
    %100 = vector.shape_cast %97 : vector<1x32xf32> to vector<1x32xf32>
    %101 = vector.broadcast %100 : vector<1x32xf32> to vector<8x32xf32>
    %102 = arith.select %99, %101, %79 : vector<8x32xi1>, vector<8x32xf32>
    %103 = vector.extract_strided_slice %5 {offsets = [4, 0], sizes = [1, 128], strides = [1, 1]} : vector<8x128xf32> to vector<1x128xf32>
    %cst_18 = arith.constant dense<0.000000e+00> : vector<1x128xf32>
    %104 = tpu.matmul %97, %6, %cst_18 {dimension_numbers = #tpu.dot_dimension_numbers<[1], [0], [0], [1], [0, 0, 1, 1], [], []>} : vector<1x32xf32>, vector<32x128xf32>, vector<1x128xf32> -> vector<1x128xf32>
    %105 = arith.addf %103, %104 : vector<1x128xf32>
    %106 = arith.negf %105 : vector<1x128xf32>
    %107 = math.exp %106 : vector<1x128xf32>
    %cst_19 = arith.constant 1.000000e+00 : f32
    %108 = vector.broadcast %cst_19 : f32 to vector<1x128xf32>
    %109 = arith.addf %108, %107 : vector<1x128xf32>
    %110 = arith.divf %108, %109 : vector<1x128xf32>
    %111 = math.tanh %105 : vector<1x128xf32>
    %112 = vector.extract_strided_slice %110 {offsets = [0, 0], sizes = [1, 32], strides = [1, 1]} : vector<1x128xf32> to vector<1x32xf32>
    %113 = vector.extract_strided_slice %110 {offsets = [0, 32], sizes = [1, 32], strides = [1, 1]} : vector<1x128xf32> to vector<1x32xf32>
    %114 = vector.extract_strided_slice %111 {offsets = [0, 64], sizes = [1, 32], strides = [1, 1]} : vector<1x128xf32> to vector<1x32xf32>
    %115 = vector.extract_strided_slice %110 {offsets = [0, 96], sizes = [1, 32], strides = [1, 1]} : vector<1x128xf32> to vector<1x32xf32>
    %116 = arith.mulf %113, %95 : vector<1x32xf32>
    %117 = arith.mulf %112, %114 : vector<1x32xf32>
    %118 = arith.addf %116, %117 : vector<1x32xf32>
    %119 = math.tanh %118 : vector<1x32xf32>
    %120 = arith.mulf %115, %119 : vector<1x32xf32>
    %c4_i32 = arith.constant 4 : i32
    %121 = vector.broadcast %c4_i32 : i32 to vector<8x32xi32>
    %122 = arith.cmpi eq, %10, %121 : vector<8x32xi32>
    %123 = vector.shape_cast %120 : vector<1x32xf32> to vector<1x32xf32>
    %124 = vector.broadcast %123 : vector<1x32xf32> to vector<8x32xf32>
    %125 = arith.select %122, %124, %102 : vector<8x32xi1>, vector<8x32xf32>
    %126 = vector.extract_strided_slice %5 {offsets = [5, 0], sizes = [1, 128], strides = [1, 1]} : vector<8x128xf32> to vector<1x128xf32>
    %cst_20 = arith.constant dense<0.000000e+00> : vector<1x128xf32>
    %127 = tpu.matmul %120, %6, %cst_20 {dimension_numbers = #tpu.dot_dimension_numbers<[1], [0], [0], [1], [0, 0, 1, 1], [], []>} : vector<1x32xf32>, vector<32x128xf32>, vector<1x128xf32> -> vector<1x128xf32>
    %128 = arith.addf %126, %127 : vector<1x128xf32>
    %129 = arith.negf %128 : vector<1x128xf32>
    %130 = math.exp %129 : vector<1x128xf32>
    %cst_21 = arith.constant 1.000000e+00 : f32
    %131 = vector.broadcast %cst_21 : f32 to vector<1x128xf32>
    %132 = arith.addf %131, %130 : vector<1x128xf32>
    %133 = arith.divf %131, %132 : vector<1x128xf32>
    %134 = math.tanh %128 : vector<1x128xf32>
    %135 = vector.extract_strided_slice %133 {offsets = [0, 0], sizes = [1, 32], strides = [1, 1]} : vector<1x128xf32> to vector<1x32xf32>
    %136 = vector.extract_strided_slice %133 {offsets = [0, 32], sizes = [1, 32], strides = [1, 1]} : vector<1x128xf32> to vector<1x32xf32>
    %137 = vector.extract_strided_slice %134 {offsets = [0, 64], sizes = [1, 32], strides = [1, 1]} : vector<1x128xf32> to vector<1x32xf32>
    %138 = vector.extract_strided_slice %133 {offsets = [0, 96], sizes = [1, 32], strides = [1, 1]} : vector<1x128xf32> to vector<1x32xf32>
    %139 = arith.mulf %136, %118 : vector<1x32xf32>
    %140 = arith.mulf %135, %137 : vector<1x32xf32>
    %141 = arith.addf %139, %140 : vector<1x32xf32>
    %142 = math.tanh %141 : vector<1x32xf32>
    %143 = arith.mulf %138, %142 : vector<1x32xf32>
    %c5_i32 = arith.constant 5 : i32
    %144 = vector.broadcast %c5_i32 : i32 to vector<8x32xi32>
    %145 = arith.cmpi eq, %10, %144 : vector<8x32xi32>
    %146 = vector.shape_cast %143 : vector<1x32xf32> to vector<1x32xf32>
    %147 = vector.broadcast %146 : vector<1x32xf32> to vector<8x32xf32>
    %148 = arith.select %145, %147, %125 : vector<8x32xi1>, vector<8x32xf32>
    %149 = vector.extract_strided_slice %5 {offsets = [6, 0], sizes = [1, 128], strides = [1, 1]} : vector<8x128xf32> to vector<1x128xf32>
    %cst_22 = arith.constant dense<0.000000e+00> : vector<1x128xf32>
    %150 = tpu.matmul %143, %6, %cst_22 {dimension_numbers = #tpu.dot_dimension_numbers<[1], [0], [0], [1], [0, 0, 1, 1], [], []>} : vector<1x32xf32>, vector<32x128xf32>, vector<1x128xf32> -> vector<1x128xf32>
    %151 = arith.addf %149, %150 : vector<1x128xf32>
    %152 = arith.negf %151 : vector<1x128xf32>
    %153 = math.exp %152 : vector<1x128xf32>
    %cst_23 = arith.constant 1.000000e+00 : f32
    %154 = vector.broadcast %cst_23 : f32 to vector<1x128xf32>
    %155 = arith.addf %154, %153 : vector<1x128xf32>
    %156 = arith.divf %154, %155 : vector<1x128xf32>
    %157 = math.tanh %151 : vector<1x128xf32>
    %158 = vector.extract_strided_slice %156 {offsets = [0, 0], sizes = [1, 32], strides = [1, 1]} : vector<1x128xf32> to vector<1x32xf32>
    %159 = vector.extract_strided_slice %156 {offsets = [0, 32], sizes = [1, 32], strides = [1, 1]} : vector<1x128xf32> to vector<1x32xf32>
    %160 = vector.extract_strided_slice %157 {offsets = [0, 64], sizes = [1, 32], strides = [1, 1]} : vector<1x128xf32> to vector<1x32xf32>
    %161 = vector.extract_strided_slice %156 {offsets = [0, 96], sizes = [1, 32], strides = [1, 1]} : vector<1x128xf32> to vector<1x32xf32>
    %162 = arith.mulf %159, %141 : vector<1x32xf32>
    %163 = arith.mulf %158, %160 : vector<1x32xf32>
    %164 = arith.addf %162, %163 : vector<1x32xf32>
    %165 = math.tanh %164 : vector<1x32xf32>
    %166 = arith.mulf %161, %165 : vector<1x32xf32>
    %c6_i32 = arith.constant 6 : i32
    %167 = vector.broadcast %c6_i32 : i32 to vector<8x32xi32>
    %168 = arith.cmpi eq, %10, %167 : vector<8x32xi32>
    %169 = vector.shape_cast %166 : vector<1x32xf32> to vector<1x32xf32>
    %170 = vector.broadcast %169 : vector<1x32xf32> to vector<8x32xf32>
    %171 = arith.select %168, %170, %148 : vector<8x32xi1>, vector<8x32xf32>
    %172 = vector.extract_strided_slice %5 {offsets = [7, 0], sizes = [1, 128], strides = [1, 1]} : vector<8x128xf32> to vector<1x128xf32>
    %cst_24 = arith.constant dense<0.000000e+00> : vector<1x128xf32>
    %173 = tpu.matmul %166, %6, %cst_24 {dimension_numbers = #tpu.dot_dimension_numbers<[1], [0], [0], [1], [0, 0, 1, 1], [], []>} : vector<1x32xf32>, vector<32x128xf32>, vector<1x128xf32> -> vector<1x128xf32>
    %174 = arith.addf %172, %173 : vector<1x128xf32>
    %175 = arith.negf %174 : vector<1x128xf32>
    %176 = math.exp %175 : vector<1x128xf32>
    %cst_25 = arith.constant 1.000000e+00 : f32
    %177 = vector.broadcast %cst_25 : f32 to vector<1x128xf32>
    %178 = arith.addf %177, %176 : vector<1x128xf32>
    %179 = arith.divf %177, %178 : vector<1x128xf32>
    %180 = math.tanh %174 : vector<1x128xf32>
    %181 = vector.extract_strided_slice %179 {offsets = [0, 0], sizes = [1, 32], strides = [1, 1]} : vector<1x128xf32> to vector<1x32xf32>
    %182 = vector.extract_strided_slice %179 {offsets = [0, 32], sizes = [1, 32], strides = [1, 1]} : vector<1x128xf32> to vector<1x32xf32>
    %183 = vector.extract_strided_slice %180 {offsets = [0, 64], sizes = [1, 32], strides = [1, 1]} : vector<1x128xf32> to vector<1x32xf32>
    %184 = vector.extract_strided_slice %179 {offsets = [0, 96], sizes = [1, 32], strides = [1, 1]} : vector<1x128xf32> to vector<1x32xf32>
    %185 = arith.mulf %182, %164 : vector<1x32xf32>
    %186 = arith.mulf %181, %183 : vector<1x32xf32>
    %187 = arith.addf %185, %186 : vector<1x32xf32>
    %188 = math.tanh %187 : vector<1x32xf32>
    %189 = arith.mulf %184, %188 : vector<1x32xf32>
    %c7_i32 = arith.constant 7 : i32
    %190 = vector.broadcast %c7_i32 : i32 to vector<8x32xi32>
    %191 = arith.cmpi eq, %10, %190 : vector<8x32xi32>
    %192 = vector.shape_cast %189 : vector<1x32xf32> to vector<1x32xf32>
    %193 = vector.broadcast %192 : vector<1x32xf32> to vector<8x32xf32>
    %194 = arith.select %191, %193, %171 : vector<8x32xi1>, vector<8x32xf32>
    %c0_26 = arith.constant 0 : index
    %c0_27 = arith.constant 0 : index
    %195 = vector.load %arg4[%c0_26, %c0_27] : memref<32x128xf32, #tpu.memory_space<vmem>>, vector<32x128xf32>
    %cst_28 = arith.constant dense<0.000000e+00> : vector<8x128xf32>
    %196 = tpu.matmul %194, %195, %cst_28 {dimension_numbers = #tpu.dot_dimension_numbers<[1], [0], [0], [1], [0, 0, 1, 1], [], []>} : vector<8x32xf32>, vector<32x128xf32>, vector<8x128xf32> -> vector<8x128xf32>
    %c0_29 = arith.constant 0 : index
    %c0_30 = arith.constant 0 : index
    %197 = vector.load %arg5[%c0_29, %c0_30] : memref<1x128xf32, #tpu.memory_space<vmem>>, vector<1x128xf32>
    %198 = vector.broadcast %197 : vector<1x128xf32> to vector<8x128xf32>
    %199 = arith.addf %196, %198 : vector<8x128xf32>
    %cst_31 = arith.constant 0.000000e+00 : f32
    %200 = vector.broadcast %cst_31 : f32 to vector<8x128xf32>
    %201 = arith.maximumf %199, %200 : vector<8x128xf32>
    %c0_32 = arith.constant 0 : index
    %c0_33 = arith.constant 0 : index
    %202 = vector.load %arg6[%c0_32, %c0_33] : memref<1x128xf32, #tpu.memory_space<vmem>>, vector<1x128xf32>
    %203 = vector.broadcast %202 : vector<1x128xf32> to vector<8x128xf32>
    %204 = arith.addf %201, %203 : vector<8x128xf32>
    %cst_34 = arith.constant dense<0xFF800000> : vector<8xf32>
    %205 = vector.multi_reduction <maximumf>, %204, %cst_34 [1] : vector<8x128xf32> to vector<8xf32>
    %206 = vector.shape_cast %205 : vector<8xf32> to vector<8x1xf32>
    %207 = vector.broadcast %206 : vector<8x1xf32> to vector<8x128xf32>
    %208 = arith.subf %204, %207 : vector<8x128xf32>
    %209 = math.exp %208 : vector<8x128xf32>
    %cst_35 = arith.constant dense<0.000000e+00> : vector<8xf32>
    %210 = vector.multi_reduction <add>, %209, %cst_35 [1] : vector<8x128xf32> to vector<8xf32>
    %211 = vector.shape_cast %210 : vector<8xf32> to vector<8x1xf32>
    %212 = math.log %211 : vector<8x1xf32>
    %213 = vector.broadcast %206 : vector<8x1xf32> to vector<8x128xf32>
    %214 = arith.subf %204, %213 : vector<8x128xf32>
    %215 = vector.broadcast %212 : vector<8x1xf32> to vector<8x128xf32>
    %216 = arith.subf %214, %215 : vector<8x128xf32>
    %c0_36 = arith.constant 0 : index
    %c0_37 = arith.constant 0 : index
    %217 = vector.load %arg7[%c0_36, %c0_37] : memref<8x128xf32, #tpu.memory_space<vmem>>, vector<8x128xf32>
    tpu.vector_store %arg7[%c0_36, %c0_37], %216 {strides = array<i32>} : memref<8x128xf32, #tpu.memory_space<vmem>>, vector<8x128xf32>,
    %c0_38 = arith.constant 0 : index
    %c0_39 = arith.constant 0 : index
    %218 = vector.load %arg8[%c0_38, %c0_39] : memref<1x32xf32, #tpu.memory_space<vmem>>, vector<1x32xf32>
    tpu.vector_store %arg8[%c0_38, %c0_39], %189 {strides = array<i32>} : memref<1x32xf32, #tpu.memory_space<vmem>>, vector<1x32xf32>,
    %c0_40 = arith.constant 0 : index
    %c0_41 = arith.constant 0 : index
    %219 = vector.load %arg9[%c0_40, %c0_41] : memref<1x32xf32, #tpu.memory_space<vmem>>, vector<1x32xf32>
    tpu.vector_store %arg9[%c0_40, %c0_41], %187 {strides = array<i32>} : memref<1x32xf32, #tpu.memory_space<vmem>>, vector<1x32xf32>,
    return
  }
}

</mosaic_0001>

<llo_original>
// kernel: tpu_custom_call.1
$region0: #{tpu_custom_call.1}
  #allocation0 [shape = 'u32[]', space=smem, size = 0x4, offset = 0x4, fixed_abs, tag = 'smem constant byte address 0x4 - core index']
  #allocation1 [shape = 'u32[144,128]{1,0:T(1,128)}', space=vmem, size = 0x12000, scoped, tag = 'internal scratch']
  %s0 = inlined_call_operand.hbm [shape: f32[8,16], index: 0, kind: input, shape index: {}]
  %s1 = inlined_call_operand.hbm [shape: f32[16,128], index: 1, kind: input, shape index: {}]
  %s2 = inlined_call_operand.hbm [shape: f32[32,128], index: 2, kind: input, shape index: {}]
  %s3 = inlined_call_operand.vmem [shape: f32[1,128], index: 3, kind: input, shape index: {}]
  %s4 = inlined_call_operand.hbm [shape: f32[32,128], index: 4, kind: input, shape index: {}]
  %s5 = inlined_call_operand.vmem [shape: f32[1,128], index: 5, kind: input, shape index: {}]
  %s6 = inlined_call_operand.vmem [shape: f32[1,128], index: 6, kind: input, shape index: {}]
  %s7 = inlined_call_operand.hbm [shape: f32[8,128], index: 7, kind: output, shape index: {0}]
  %s8 = inlined_call_operand.hbm [shape: f32[1,32], index: 8, kind: output, shape index: {1}]
  %s9 = inlined_call_operand.hbm [shape: f32[1,32], index: 9, kind: output, shape index: {2}]
  %10 = xla_tuple %s7, %s8, %s9
  %s11 = sld [smem:[#allocation0]]
  $region70: #{tpu_custom_call.1} parent=0
    _
  %s13 = ssub.s32 1, %s11
  %s14 = scalar_select 0, %s13, %s11
  $region1: #{tpu_custom_call.1} parent=0
    #allocation2 [shape = 'u8[4096]{0}', space=vmem, size = 0x1000, scoped, tag = 'input window, operand 0, single buffered']
    #allocation3 [shape = 's32[1]{0}', space=sflag, size = 0x4, scoped, tag = 'scoped memory for tpu_custom_call.1']
    #allocation4 [shape = 's32[1]{0}', space=sflag, size = 0x4, scoped, tag = 'scoped memory for tpu_custom_call.1']
    #allocation5 [shape = 'u8[8192]{0}', space=vmem, size = 0x2000, scoped, tag = 'input window, operand 1, single buffered']
    #allocation6 [shape = 's32[1]{0}', space=sflag, size = 0x4, scoped, tag = 'scoped memory for tpu_custom_call.1']
    #allocation7 [shape = 'u8[16384]{0}', space=vmem, size = 0x4000, scoped, tag = 'input window, operand 2, single buffered']
    #allocation8 [shape = 'u8[16384]{0}', space=vmem, size = 0x4000, scoped, tag = 'input window, operand 4, single buffered']
    #allocation9 [shape = 's32[1]{0}', space=sflag, size = 0x4, scoped, tag = 'scoped memory for tpu_custom_call.1']
    #allocation10 [shape = 'u8[4096]{0}', space=vmem, size = 0x1000, scoped, tag = 'output window, operand 0, single buffered']
    #allocation11 [shape = 'u8[512]{0}', space=vmem, size = 0x400, scoped, tag = 'output window, operand 1, single buffered']
    #allocation12 [shape = 's32[1]{0}', space=sflag, size = 0x4, scoped, tag = 'scoped memory for tpu_custom_call.1']
    #allocation13 [shape = 'u8[512]{0}', space=vmem, size = 0x400, scoped, tag = 'output window, operand 2, single buffered']
    %15 = vsyncpa [#allocation3], 0
    %16 = vsyncpa [#allocation6], 0
    %17 = vsyncpa [#allocation9], 0
    %18 = vsyncpa [#allocation4], 0
    %19 = vsyncpa [#allocation12], 0
    // Predicated region
    $region2: #{tpu_custom_call.1} parent=1 // pred_check
      _
    $region3: #{tpu_custom_call.1} parent=1 // pred_check_branch
      %21 = sbr.rel (0) target = $region5
    $region4: #{tpu_custom_call.1} parent=1 // pred_region
      %s23 = ssub.s32 128, 128
      %24 = vsyncadd [#allocation3], %s23
      %s26 = sshll.u32 [#allocation2], 4
      %s27 = int_to_ptr.vmem [resolvable:$true] %s26
      %29 = dma.hbm_to_vmem [thread:$0]  %s0, 128, %s27, [#allocation3]
    $region5: #{tpu_custom_call.1} parent=1 // pred_fallthru
      _
    // Predicated region
    $region6: #{tpu_custom_call.1} parent=1 // pred_check
      _
    $region7: #{tpu_custom_call.1} parent=1 // pred_check_branch
      %31 = sbr.rel (0) target = $region9
    $region8: #{tpu_custom_call.1} parent=1 // pred_region
      %s33 = ssub.s32 256, 256
      %34 = vsyncadd [#allocation6], %s33
      %s35 = sshll.u32 [#allocation5], 4
      %s36 = int_to_ptr.vmem [resolvable:$true] %s35
      %41 = dma.hbm_to_vmem [thread:$0]  %s1, 256, %s36, [#allocation6], 128, 128, 8
    $region9: #{tpu_custom_call.1} parent=1 // pred_fallthru
      _
    // Predicated region
    $region10: #{tpu_custom_call.1} parent=1 // pred_check
      _
    $region11: #{tpu_custom_call.1} parent=1 // pred_check_branch
      %43 = sbr.rel (0) target = $region13
    $region12: #{tpu_custom_call.1} parent=1 // pred_region
      %s45 = ssub.s32 512, 512
      %46 = vsyncadd [#allocation6], %s45
      %s47 = sshll.u32 [#allocation7], 4
      %s48 = int_to_ptr.vmem [resolvable:$true] %s47
      %53 = dma.hbm_to_vmem [thread:$0]  %s2, 512, %s48, [#allocation6], 128, 128, 8
    $region13: #{tpu_custom_call.1} parent=1 // pred_fallthru
      _
    // Predicated region
    $region14: #{tpu_custom_call.1} parent=1 // pred_check
      _
    $region15: #{tpu_custom_call.1} parent=1 // pred_check_branch
      %55 = sbr.rel (0) target = $region17
    $region16: #{tpu_custom_call.1} parent=1 // pred_region
      _
    $region17: #{tpu_custom_call.1} parent=1 // pred_fallthru
      _
    // Predicated region
    $region18: #{tpu_custom_call.1} parent=1 // pred_check
      _
    $region19: #{tpu_custom_call.1} parent=1 // pred_check_branch
      %57 = sbr.rel (0) target = $region21
    $region20: #{tpu_custom_call.1} parent=1 // pred_region
      %s59 = ssub.s32 512, 512
      %60 = vsyncadd [#allocation9], %s59
      %s61 = sshll.u32 [#allocation8], 4
      %s62 = int_to_ptr.vmem [resolvable:$true] %s61
      %67 = dma.hbm_to_vmem [thread:$0]  %s4, 512, %s62, [#allocation9], 128, 128, 8
    $region21: #{tpu_custom_call.1} parent=1 // pred_fallthru
      _
    // Predicated region
    $region22: #{tpu_custom_call.1} parent=1 // pred_check
      _
    $region23: #{tpu_custom_call.1} parent=1 // pred_check_branch
      %69 = sbr.rel (0) target = $region25
    $region24: #{tpu_custom_call.1} parent=1 // pred_region
      _
    $region25: #{tpu_custom_call.1} parent=1 // pred_fallthru
      _
    // Predicated region
    $region26: #{tpu_custom_call.1} parent=1 // pred_check
      _
    $region27: #{tpu_custom_call.1} parent=1 // pred_check_branch
      %71 = sbr.rel (0) target = $region29
    $region28: #{tpu_custom_call.1} parent=1 // pred_region
      _
    $region29: #{tpu_custom_call.1} parent=1 // pred_fallthru
      _
    // Predicated region
    $region30: #{tpu_custom_call.1} parent=1 // pred_check
      _
    $region31: #{tpu_custom_call.1} parent=1 // pred_check_branch
      %73 = sbr.rel (0) target = $region33
    $region32: #{tpu_custom_call.1} parent=1 // pred_region
      %74 = dma.done [#allocation3], 128
    $region33: #{tpu_custom_call.1} parent=1 // pred_fallthru
      _
    // Predicated region
    $region34: #{tpu_custom_call.1} parent=1 // pred_check
      _
    $region35: #{tpu_custom_call.1} parent=1 // pred_check_branch
      %76 = sbr.rel (0) target = $region37
    $region36: #{tpu_custom_call.1} parent=1 // pred_region
      %77 = dma.done [#allocation6], 256
    $region37: #{tpu_custom_call.1} parent=1 // pred_fallthru
      _
    // Predicated region
    $region38: #{tpu_custom_call.1} parent=1 // pred_check
      _
    $region39: #{tpu_custom_call.1} parent=1 // pred_check_branch
      %79 = sbr.rel (0) target = $region41
    $region40: #{tpu_custom_call.1} parent=1 // pred_region
      %80 = dma.done [#allocation6], 512
    $region41: #{tpu_custom_call.1} parent=1 // pred_fallthru
      _
    // Predicated region
    $region42: #{tpu_custom_call.1} parent=1 // pred_check
      _
    $region43: #{tpu_custom_call.1} parent=1 // pred_check_branch
      %82 = sbr.rel (0) target = $region45
    $region44: #{tpu_custom_call.1} parent=1 // pred_region
      %83 = dma.done [#allocation9], 512
    $region45: #{tpu_custom_call.1} parent=1 // pred_fallthru
      _
    %v84 = vld [vmem:[#allocation2] sm:$0xff]
    %v85 = vld [vmem:[#allocation5] sm:$0xff]
    %v86 = vld [vmem:[#allocation5 + $0x8] sm:$0xff]
    %v87 = vld [vmem:[%s3] sm:$0x1]
    %v89 = vlaneseq
    %v90 = vshrl.u32 %v89, 7
    %v91 = vsub.s32 0, %v90
    %v92 = vrot.slane %v87, %v91
    %vm94 = vcmask 130048
    %v96 = vsel %vm94, %v84, 0
    %98 = vmatprep.subr.mxu0 0.0
    %99 = vmatpush1.msra.mxu0 %v85
    %100 = vmatprep.subr.mxu0 0.0
    %101 = vmatpush1.msra.mxu0 %v86
    %102 = vmatprep.subr.mxu0 0.0
    %103 = vmatpush1.msra.mxu0 0.0
    %104 = vmatprep.subr.mxu0 0.0
    %105 = vmatpush1.msra.mxu0 0.0
    %106 = vmatprep.subr.mxu0 0.0
    %107 = vmatpush1.msra.mxu0 0.0
    %108 = vmatprep.subr.mxu0 0.0
    %109 = vmatpush1.msra.mxu0 0.0
    %110 = vmatprep.subr.mxu0 0.0
    %111 = vmatpush1.msra.mxu0 0.0
    %112 = vmatprep.subr.mxu0 0.0
    %113 = vmatpush1.msra.mxu0 0.0
    %114 = vmatprep.subr.mxu0 0.0
    %115 = vmatpush1.msra.mxu0 0.0
    %116 = vmatprep.subr.mxu0 0.0
    %117 = vmatpush1.msra.mxu0 0.0
    %118 = vmatprep.subr.mxu0 0.0
    %119 = vmatpush1.msra.mxu0 0.0
    %120 = vmatprep.subr.mxu0 0.0
    %121 = vmatpush1.msra.mxu0 0.0
    %122 = vmatprep.subr.mxu0 0.0
    %123 = vmatpush1.msra.mxu0 0.0
    %124 = vmatprep.subr.mxu0 0.0
    %125 = vmatpush1.msra.mxu0 0.0
    %126 = vmatprep.subr.mxu0 0.0
    %127 = vmatpush1.msra.mxu0 0.0
    %128 = vmatprep.subr.mxu0 0.0
    %129 = vmatpush1.msra.mxu0 0.0
    %130 = vmatprep.subr.mxu0 0.0
    %131 = vmatpush1.msra.mxu0 0.0
    %132 = vmatprep.subr.mxu0 0.0
    %133 = vmatpush1.msra.mxu0 0.0
    %134 = vmatprep.subr.mxu0 0.0
    %135 = vmatpush1.msra.mxu0 0.0
    %136 = vmatprep.subr.mxu0 0.0
    %137 = vmatpush1.msra.mxu0 0.0
    %138 = vmatprep.subr.mxu0 0.0
    %139 = vmatpush1.msra.mxu0 0.0
    %140 = vmatprep.subr.mxu0 0.0
    %141 = vmatpush1.msra.mxu0 0.0
    %142 = vmatprep.subr.mxu0 0.0
    %143 = vmatpush1.msra.mxu0 0.0
    %144 = vmatprep.subr.mxu0 0.0
    %145 = vmatpush1.msra.mxu0 0.0
    %146 = vmatprep.subr.mxu0 0.0
    %147 = vmatpush1.msra.mxu0 0.0
    %148 = vmatprep.subr.mxu0 0.0
    %149 = vmatpush1.msra.mxu0 0.0
    %150 = vmatprep.subr.mxu0 0.0
    %151 = vmatpush1.msra.mxu0 0.0
    %152 = vmatprep.subr.mxu0 0.0
    %153 = vmatpush1.msra.mxu0 0.0
    %154 = vmatprep.subr.mxu0 0.0
    %155 = vmatpush1.msra.mxu0 0.0
    %156 = vmatprep.subr.mxu0 0.0
    %157 = vmatpush1.msra.mxu0 0.0
    %158 = vmatprep.subr.mxu0 0.0
    %159 = vmatpush1.msra.mxu0 0.0
    %160 = vmatprep.subr.mxu0 0.0
    %161 = vmatpush1.msra.mxu0 0.0
    %162 = vmatprep.mubr.f32.mxu0 0.0
    %163 = vmatmul.mubr.f32.gmra.mrb[0].mxu0 %v96
    %v164 = vpop.f32.mrb[0].mxu0
    %v165 = vadd.f32 %v92, %v164
    %v166 = vpop.f32.mrb[0].mxu0
    %167 = vdwg.mxu0
    %v168 = vld [vmem:[#allocation7] sm:$0xff]
    %v169 = vld [vmem:[#allocation7 + $0x8] sm:$0xff]
    %v170 = vld [vmem:[#allocation7 + $0x10] sm:$0xff]
    %v171 = vld [vmem:[#allocation7 + $0x18] sm:$0xff]
    %v172 = vlaneseq
    %v173 = vshrl.u32 %v172, 7
    %vm174 = vcmask 261120
    %v176 = vsel %vm174, 0.0, 0
    %178 = vmatprep.subr.mxu0 0.0
    %179 = vmatpush1.msra.mxu0 %v168
    %180 = vmatprep.subr.mxu0 0.0
    %181 = vmatpush1.msra.mxu0 %v169
    %182 = vmatprep.subr.mxu0 0.0
    %183 = vmatpush1.msra.mxu0 %v170
    %184 = vmatprep.subr.mxu0 0.0
    %185 = vmatpush1.msra.mxu0 %v171
    %186 = vmatprep.subr.mxu0 0.0
    %187 = vmatpush1.msra.mxu0 0.0
    %188 = vmatprep.subr.mxu0 0.0
    %189 = vmatpush1.msra.mxu0 0.0
    %190 = vmatprep.subr.mxu0 0.0
    %191 = vmatpush1.msra.mxu0 0.0
    %192 = vmatprep.subr.mxu0 0.0
    %193 = vmatpush1.msra.mxu0 0.0
    %194 = vmatprep.subr.mxu0 0.0
    %195 = vmatpush1.msra.mxu0 0.0
    %196 = vmatprep.subr.mxu0 0.0
    %197 = vmatpush1.msra.mxu0 0.0
    %198 = vmatprep.subr.mxu0 0.0
    %199 = vmatpush1.msra.mxu0 0.0
    %200 = vmatprep.subr.mxu0 0.0
    %201 = vmatpush1.msra.mxu0 0.0
    %202 = vmatprep.subr.mxu0 0.0
    %203 = vmatpush1.msra.mxu0 0.0
    %204 = vmatprep.subr.mxu0 0.0
    %205 = vmatpush1.msra.mxu0 0.0
    %206 = vmatprep.subr.mxu0 0.0
    %207 = vmatpush1.msra.mxu0 0.0
    %208 = vmatprep.subr.mxu0 0.0
    %209 = vmatpush1.msra.mxu0 0.0
    %210 = vmatprep.subr.mxu0 0.0
    %211 = vmatpush1.msra.mxu0 0.0
    %212 = vmatprep.subr.mxu0 0.0
    %213 = vmatpush1.msra.mxu0 0.0
    %214 = vmatprep.subr.mxu0 0.0
    %215 = vmatpush1.msra.mxu0 0.0
    %216 = vmatprep.subr.mxu0 0.0
    %217 = vmatpush1.msra.mxu0 0.0
    %218 = vmatprep.subr.mxu0 0.0
    %219 = vmatpush1.msra.mxu0 0.0
    %220 = vmatprep.subr.mxu0 0.0
    %221 = vmatpush1.msra.mxu0 0.0
    %222 = vmatprep.subr.mxu0 0.0
    %223 = vmatpush1.msra.mxu0 0.0
    %224 = vmatprep.subr.mxu0 0.0
    %225 = vmatpush1.msra.mxu0 0.0
    %226 = vmatprep.subr.mxu0 0.0
    %227 = vmatpush1.msra.mxu0 0.0
    %228 = vmatprep.subr.mxu0 0.0
    %229 = vmatpush1.msra.mxu0 0.0
    %230 = vmatprep.subr.mxu0 0.0
    %231 = vmatpush1.msra.mxu0 0.0
    %232 = vmatprep.subr.mxu0 0.0
    %233 = vmatpush1.msra.mxu0 0.0
    %234 = vmatprep.subr.mxu0 0.0
    %235 = vmatpush1.msra.mxu0 0.0
    %236 = vmatprep.subr.mxu0 0.0
    %237 = vmatpush1.msra.mxu0 0.0
    %238 = vmatprep.subr.mxu0 0.0
    %239 = vmatpush1.msra.mxu0 0.0
    %240 = vmatprep.subr.mxu0 0.0
    %241 = vmatpush1.msra.mxu0 0.0
    %242 = vmatprep.mubr.f32.mxu0 0.0
    %243 = vmatmul.mubr.f32.gmra.mrb[0].mxu0 %v176
    %v244 = vpop.f32.mrb[0].mxu0
    %v245 = vadd.f32 0.0, %v244
    %v246 = vpop.f32.mrb[0].mxu0
    %247 = vdwg.mxu0
    %v248 = vadd.f32 %v165, %v245
    %v249 = vxor.u32 %v248, 2147483648
    %v250 = vmul.f32 %v249, 1.442695
    %v251 = vpow.pop %v250
    %v252 = vadd.f32 %v251, 1.0
    %v253 = vrcp.pop %v252
    %v254 = vmul.f32 1.0, %v253
    %v255 = vtanh.pop %v248
    %v256 = vmul.f32 %v254, 0.0
    %258 = vrot.lane.b32.xlu0 %v255, 64
    %v259 = vpop.permute.xlu0 %258
    %v261 = vmul.f32 %v254, %v259
    %263 = vrot.lane.b32.xlu0 %v261, 32
    %v264 = vpop.permute.xlu0 %263
    %v266 = vadd.f32 %v256, %v264
    %v267 = vtanh.pop %v266
    %269 = vrot.lane.b32.xlu0 %v267, 64
    %v270 = vpop.permute.xlu0 %269
    %v272 = vmul.f32 %v254, %v270
    %vm273 = vcmp.eq.s32.totalorder %v173, 0
    %v274 = vlaneseq
    %v275 = vshrl.u32 %v274, 7
    %v276 = vsub.s32 0, %v275
    %v277 = vrot.slane %v272, %v276
    %v278 = vsel %vm273, %v277, 0.0
    %280 = vrot.lane.b32.xlu0 %v272, 32
    %v281 = vpop.permute.xlu0 %280
    %v282 = vsel %vm174, %v281, 0
    %284 = vmatprep.subr.mxu0 0.0
    %285 = vmatpush1.msra.mxu0 %v168
    %286 = vmatprep.subr.mxu0 0.0
    %287 = vmatpush1.msra.mxu0 %v169
    %288 = vmatprep.subr.mxu0 0.0
    %289 = vmatpush1.msra.mxu0 %v170
    %290 = vmatprep.subr.mxu0 0.0
    %291 = vmatpush1.msra.mxu0 %v171
    %292 = vmatprep.subr.mxu0 0.0
    %293 = vmatpush1.msra.mxu0 0.0
    %294 = vmatprep.subr.mxu0 0.0
    %295 = vmatpush1.msra.mxu0 0.0
    %296 = vmatprep.subr.mxu0 0.0
    %297 = vmatpush1.msra.mxu0 0.0
    %298 = vmatprep.subr.mxu0 0.0
    %299 = vmatpush1.msra.mxu0 0.0
    %300 = vmatprep.subr.mxu0 0.0
    %301 = vmatpush1.msra.mxu0 0.0
    %302 = vmatprep.subr.mxu0 0.0
    %303 = vmatpush1.msra.mxu0 0.0
    %304 = vmatprep.subr.mxu0 0.0
    %305 = vmatpush1.msra.mxu0 0.0
    %306 = vmatprep.subr.mxu0 0.0
    %307 = vmatpush1.msra.mxu0 0.0
    %308 = vmatprep.subr.mxu0 0.0
    %309 = vmatpush1.msra.mxu0 0.0
    %310 = vmatprep.subr.mxu0 0.0
    %311 = vmatpush1.msra.mxu0 0.0
    %312 = vmatprep.subr.mxu0 0.0
    %313 = vmatpush1.msra.mxu0 0.0
    %314 = vmatprep.subr.mxu0 0.0
    %315 = vmatpush1.msra.mxu0 0.0
    %316 = vmatprep.subr.mxu0 0.0
    %317 = vmatpush1.msra.mxu0 0.0
    %318 = vmatprep.subr.mxu0 0.0
    %319 = vmatpush1.msra.mxu0 0.0
    %320 = vmatprep.subr.mxu0 0.0
    %321 = vmatpush1.msra.mxu0 0.0
    %322 = vmatprep.subr.mxu0 0.0
    %323 = vmatpush1.msra.mxu0 0.0
    %324 = vmatprep.subr.mxu0 0.0
    %325 = vmatpush1.msra.mxu0 0.0
    %326 = vmatprep.subr.mxu0 0.0
    %327 = vmatpush1.msra.mxu0 0.0
    %328 = vmatprep.subr.mxu0 0.0
    %329 = vmatpush1.msra.mxu0 0.0
    %330 = vmatprep.subr.mxu0 0.0
    %331 = vmatpush1.msra.mxu0 0.0
    %332 = vmatprep.subr.mxu0 0.0
    %333 = vmatpush1.msra.mxu0 0.0
    %334 = vmatprep.subr.mxu0 0.0
    %335 = vmatpush1.msra.mxu0 0.0
    %336 = vmatprep.subr.mxu0 0.0
    %337 = vmatpush1.msra.mxu0 0.0
    %338 = vmatprep.subr.mxu0 0.0
    %339 = vmatpush1.msra.mxu0 0.0
    %340 = vmatprep.subr.mxu0 0.0
    %341 = vmatpush1.msra.mxu0 0.0
    %342 = vmatprep.subr.mxu0 0.0
    %343 = vmatpush1.msra.mxu0 0.0
    %344 = vmatprep.subr.mxu0 0.0
    %345 = vmatpush1.msra.mxu0 0.0
    %346 = vmatprep.subr.mxu0 0.0
    %347 = vmatpush1.msra.mxu0 0.0
    %348 = vmatprep.mubr.f32.mxu0 0.0
    %349 = vmatmul.mubr.f32.gmra.mrb[0].mxu0 %v282
    %v350 = vpop.f32.mrb[0].mxu0
    %v351 = vadd.f32 0.0, %v350
    %v352 = vpop.f32.mrb[0].mxu0
    %353 = vdwg.mxu0
    %v355 = vrot.slane %v351, 7
    %v357 = vadd.f32 %v165, %v355
    %v358 = vxor.u32 %v357, 2147483648
    %v359 = vmul.f32 %v358, 1.442695
    %v360 = vpow.pop %v359
    %v361 = vadd.f32 %v360, 1.0
    %v362 = vrcp.pop %v361
    %v363 = vmul.f32 1.0, %v362
    %v364 = vtanh.pop %v357
    %v366 = vrot.slane %v266, 7
    %v368 = vmul.f32 %v363, %v366
    %370 = vrot.lane.b32.xlu0 %v364, 64
    %v371 = vpop.permute.xlu0 %370
    %v373 = vmul.f32 %v363, %v371
    %375 = vrot.lane.b32.xlu0 %v373, 32
    %v376 = vpop.permute.xlu0 %375
    %v378 = vadd.f32 %v368, %v376
    %v379 = vtanh.pop %v378
    %381 = vrot.lane.b32.xlu0 %v379, 64
    %v382 = vpop.permute.xlu0 %381
    %v384 = vmul.f32 %v363, %v382
    %vm385 = vcmp.eq.s32.totalorder %v173, 1
    %v386 = vlaneseq
    %v387 = vshrl.u32 %v386, 7
    %v388 = vsub.s32 1, %v387
    %v389 = vrot.slane %v384, %v388
    %v390 = vsel %vm385, %v389, %v278
    %v392 = vrot.slane %v384, 1
    %393 = vrot.lane.b32.xlu0 %v392, 32
    %v394 = vpop.permute.xlu0 %393
    %v395 = vsel %vm174, %v394, 0
    %397 = vmatprep.subr.mxu0 0.0
    %398 = vmatpush1.msra.mxu0 %v168
    %399 = vmatprep.subr.mxu0 0.0
    %400 = vmatpush1.msra.mxu0 %v169
    %401 = vmatprep.subr.mxu0 0.0
    %402 = vmatpush1.msra.mxu0 %v170
    %403 = vmatprep.subr.mxu0 0.0
    %404 = vmatpush1.msra.mxu0 %v171
    %405 = vmatprep.subr.mxu0 0.0
    %406 = vmatpush1.msra.mxu0 0.0
    %407 = vmatprep.subr.mxu0 0.0
    %408 = vmatpush1.msra.mxu0 0.0
    %409 = vmatprep.subr.mxu0 0.0
    %410 = vmatpush1.msra.mxu0 0.0
    %411 = vmatprep.subr.mxu0 0.0
    %412 = vmatpush1.msra.mxu0 0.0
    %413 = vmatprep.subr.mxu0 0.0
    %414 = vmatpush1.msra.mxu0 0.0
    %415 = vmatprep.subr.mxu0 0.0
    %416 = vmatpush1.msra.mxu0 0.0
    %417 = vmatprep.subr.mxu0 0.0
    %418 = vmatpush1.msra.mxu0 0.0
    %419 = vmatprep.subr.mxu0 0.0
    %420 = vmatpush1.msra.mxu0 0.0
    %421 = vmatprep.subr.mxu0 0.0
    %422 = vmatpush1.msra.mxu0 0.0
    %423 = vmatprep.subr.mxu0 0.0
    %424 = vmatpush1.msra.mxu0 0.0
    %425 = vmatprep.subr.mxu0 0.0
    %426 = vmatpush1.msra.mxu0 0.0
    %427 = vmatprep.subr.mxu0 0.0
    %428 = vmatpush1.msra.mxu0 0.0
    %429 = vmatprep.subr.mxu0 0.0
    %430 = vmatpush1.msra.mxu0 0.0
    %431 = vmatprep.subr.mxu0 0.0
    %432 = vmatpush1.msra.mxu0 0.0
    %433 = vmatprep.subr.mxu0 0.0
    %434 = vmatpush1.msra.mxu0 0.0
    %435 = vmatprep.subr.mxu0 0.0
    %436 = vmatpush1.msra.mxu0 0.0
    %437 = vmatprep.subr.mxu0 0.0
    %438 = vmatpush1.msra.mxu0 0.0
    %439 = vmatprep.subr.mxu0 0.0
    %440 = vmatpush1.msra.mxu0 0.0
    %441 = vmatprep.subr.mxu0 0.0
    %442 = vmatpush1.msra.mxu0 0.0
    %443 = vmatprep.subr.mxu0 0.0
    %444 = vmatpush1.msra.mxu0 0.0
    %445 = vmatprep.subr.mxu0 0.0
    %446 = vmatpush1.msra.mxu0 0.0
    %447 = vmatprep.subr.mxu0 0.0
    %448 = vmatpush1.msra.mxu0 0.0
    %449 = vmatprep.subr.mxu0 0.0
    %450 = vmatpush1.msra.mxu0 0.0
    %451 = vmatprep.subr.mxu0 0.0
    %452 = vmatpush1.msra.mxu0 0.0
    %453 = vmatprep.subr.mxu0 0.0
    %454 = vmatpush1.msra.mxu0 0.0
    %455 = vmatprep.subr.mxu0 0.0
    %456 = vmatpush1.msra.mxu0 0.0
    %457 = vmatprep.subr.mxu0 0.0
    %458 = vmatpush1.msra.mxu0 0.0
    %459 = vmatprep.subr.mxu0 0.0
    %460 = vmatpush1.msra.mxu0 0.0
    %461 = vmatprep.mubr.f32.mxu0 0.0
    %462 = vmatmul.mubr.f32.gmra.mrb[0].mxu0 %v395
    %v463 = vpop.f32.mrb[0].mxu0
    %v464 = vadd.f32 0.0, %v463
    %v465 = vpop.f32.mrb[0].mxu0
    %466 = vdwg.mxu0
    %v468 = vrot.slane %v464, 6
    %v470 = vadd.f32 %v165, %v468
    %v471 = vxor.u32 %v470, 2147483648
    %v472 = vmul.f32 %v471, 1.442695
    %v473 = vpow.pop %v472
    %v474 = vadd.f32 %v473, 1.0
    %v475 = vrcp.pop %v474
    %v476 = vmul.f32 1.0, %v475
    %v477 = vtanh.pop %v470
    %v479 = vrot.slane %v378, 7
    %v481 = vmul.f32 %v476, %v479
    %483 = vrot.lane.b32.xlu0 %v477, 64
    %v484 = vpop.permute.xlu0 %483
    %v486 = vmul.f32 %v476, %v484
    %488 = vrot.lane.b32.xlu0 %v486, 32
    %v489 = vpop.permute.xlu0 %488
    %v491 = vadd.f32 %v481, %v489
    %v492 = vtanh.pop %v491
    %494 = vrot.lane.b32.xlu0 %v492, 64
    %v495 = vpop.permute.xlu0 %494
    %v497 = vmul.f32 %v476, %v495
    %vm498 = vcmp.eq.s32.totalorder %v173, 2
    %v499 = vlaneseq
    %v500 = vshrl.u32 %v499, 7
    %v501 = vsub.s32 2, %v500
    %v502 = vrot.slane %v497, %v501
    %v503 = vsel %vm498, %v502, %v390
    %v505 = vrot.slane %v497, 2
    %506 = vrot.lane.b32.xlu0 %v505, 32
    %v507 = vpop.permute.xlu0 %506
    %v508 = vsel %vm174, %v507, 0
    %510 = vmatprep.subr.mxu0 0.0
    %511 = vmatpush1.msra.mxu0 %v168
    %512 = vmatprep.subr.mxu0 0.0
    %513 = vmatpush1.msra.mxu0 %v169
    %514 = vmatprep.subr.mxu0 0.0
    %515 = vmatpush1.msra.mxu0 %v170
    %516 = vmatprep.subr.mxu0 0.0
    %517 = vmatpush1.msra.mxu0 %v171
    %518 = vmatprep.subr.mxu0 0.0
    %519 = vmatpush1.msra.mxu0 0.0
    %520 = vmatprep.subr.mxu0 0.0
    %521 = vmatpush1.msra.mxu0 0.0
    %522 = vmatprep.subr.mxu0 0.0
    %523 = vmatpush1.msra.mxu0 0.0
    %524 = vmatprep.subr.mxu0 0.0
    %525 = vmatpush1.msra.mxu0 0.0
    %526 = vmatprep.subr.mxu0 0.0
    %527 = vmatpush1.msra.mxu0 0.0
    %528 = vmatprep.subr.mxu0 0.0
    %529 = vmatpush1.msra.mxu0 0.0
    %530 = vmatprep.subr.mxu0 0.0
    %531 = vmatpush1.msra.mxu0 0.0
    %532 = vmatprep.subr.mxu0 0.0
    %533 = vmatpush1.msra.mxu0 0.0
    %534 = vmatprep.subr.mxu0 0.0
    %535 = vmatpush1.msra.mxu0 0.0
    %536 = vmatprep.subr.mxu0 0.0
    %537 = vmatpush1.msra.mxu0 0.0
    %538 = vmatprep.subr.mxu0 0.0
    %539 = vmatpush1.msra.mxu0 0.0
    %540 = vmatprep.subr.mxu0 0.0
    %541 = vmatpush1.msra.mxu0 0.0
    %542 = vmatprep.subr.mxu0 0.0
    %543 = vmatpush1.msra.mxu0 0.0
    %544 = vmatprep.subr.mxu0 0.0
    %545 = vmatpush1.msra.mxu0 0.0
    %546 = vmatprep.subr.mxu0 0.0
    %547 = vmatpush1.msra.mxu0 0.0
    %548 = vmatprep.subr.mxu0 0.0
    %549 = vmatpush1.msra.mxu0 0.0
    %550 = vmatprep.subr.mxu0 0.0
    %551 = vmatpush1.msra.mxu0 0.0
    %552 = vmatprep.subr.mxu0 0.0
    %553 = vmatpush1.msra.mxu0 0.0
    %554 = vmatprep.subr.mxu0 0.0
    %555 = vmatpush1.msra.mxu0 0.0
    %556 = vmatprep.subr.mxu0 0.0
    %557 = vmatpush1.msra.mxu0 0.0
    %558 = vmatprep.subr.mxu0 0.0
    %559 = vmatpush1.msra.mxu0 0.0
    %560 = vmatprep.subr.mxu0 0.0
    %561 = vmatpush1.msra.mxu0 0.0
    %562 = vmatprep.subr.mxu0 0.0
    %563 = vmatpush1.msra.mxu0 0.0
    %564 = vmatprep.subr.mxu0 0.0
    %565 = vmatpush1.msra.mxu0 0.0
    %566 = vmatprep.subr.mxu0 0.0
    %567 = vmatpush1.msra.mxu0 0.0
    %568 = vmatprep.subr.mxu0 0.0
    %569 = vmatpush1.msra.mxu0 0.0
    %570 = vmatprep.subr.mxu0 0.0
    %571 = vmatpush1.msra.mxu0 0.0
    %572 = vmatprep.subr.mxu0 0.0
    %573 = vmatpush1.msra.mxu0 0.0
    %574 = vmatprep.mubr.f32.mxu0 0.0
    %575 = vmatmul.mubr.f32.gmra.mrb[0].mxu0 %v508
    %v576 = vpop.f32.mrb[0].mxu0
    %v577 = vadd.f32 0.0, %v576
    %v578 = vpop.f32.mrb[0].mxu0
    %579 = vdwg.mxu0
    %v581 = vrot.slane %v577, 5
    %v583 = vadd.f32 %v165, %v581
    %v584 = vxor.u32 %v583, 2147483648
    %v585 = vmul.f32 %v584, 1.442695
    %v586 = vpow.pop %v585
    %v587 = vadd.f32 %v586, 1.0
    %v588 = vrcp.pop %v587
    %v589 = vmul.f32 1.0, %v588
    %v590 = vtanh.pop %v583
    %v592 = vrot.slane %v491, 7
    %v594 = vmul.f32 %v589, %v592
    %596 = vrot.lane.b32.xlu0 %v590, 64
    %v597 = vpop.permute.xlu0 %596
    %v599 = vmul.f32 %v589, %v597
    %601 = vrot.lane.b32.xlu0 %v599, 32
    %v602 = vpop.permute.xlu0 %601
    %v604 = vadd.f32 %v594, %v602
    %v605 = vtanh.pop %v604
    %607 = vrot.lane.b32.xlu0 %v605, 64
    %v608 = vpop.permute.xlu0 %607
    %v610 = vmul.f32 %v589, %v608
    %vm611 = vcmp.eq.s32.totalorder %v173, 3
    %v612 = vlaneseq
    %v613 = vshrl.u32 %v612, 7
    %v614 = vsub.s32 3, %v613
    %v615 = vrot.slane %v610, %v614
    %v616 = vsel %vm611, %v615, %v503
    %v618 = vrot.slane %v610, 3
    %619 = vrot.lane.b32.xlu0 %v618, 32
    %v620 = vpop.permute.xlu0 %619
    %v621 = vsel %vm174, %v620, 0
    %623 = vmatprep.subr.mxu0 0.0
    %624 = vmatpush1.msra.mxu0 %v168
    %625 = vmatprep.subr.mxu0 0.0
    %626 = vmatpush1.msra.mxu0 %v169
    %627 = vmatprep.subr.mxu0 0.0
    %628 = vmatpush1.msra.mxu0 %v170
    %629 = vmatprep.subr.mxu0 0.0
    %630 = vmatpush1.msra.mxu0 %v171
    %631 = vmatprep.subr.mxu0 0.0
    %632 = vmatpush1.msra.mxu0 0.0
    %633 = vmatprep.subr.mxu0 0.0
    %634 = vmatpush1.msra.mxu0 0.0
    %635 = vmatprep.subr.mxu0 0.0
    %636 = vmatpush1.msra.mxu0 0.0
    %637 = vmatprep.subr.mxu0 0.0
    %638 = vmatpush1.msra.mxu0 0.0
    %639 = vmatprep.subr.mxu0 0.0
    %640 = vmatpush1.msra.mxu0 0.0
    %641 = vmatprep.subr.mxu0 0.0
    %642 = vmatpush1.msra.mxu0 0.0
    %643 = vmatprep.subr.mxu0 0.0
    %644 = vmatpush1.msra.mxu0 0.0
    %645 = vmatprep.subr.mxu0 0.0
    %646 = vmatpush1.msra.mxu0 0.0
    %647 = vmatprep.subr.mxu0 0.0
    %648 = vmatpush1.msra.mxu0 0.0
    %649 = vmatprep.subr.mxu0 0.0
    %650 = vmatpush1.msra.mxu0 0.0
    %651 = vmatprep.subr.mxu0 0.0
    %652 = vmatpush1.msra.mxu0 0.0
    %653 = vmatprep.subr.mxu0 0.0
    %654 = vmatpush1.msra.mxu0 0.0
    %655 = vmatprep.subr.mxu0 0.0
    %656 = vmatpush1.msra.mxu0 0.0
    %657 = vmatprep.subr.mxu0 0.0
    %658 = vmatpush1.msra.mxu0 0.0
    %659 = vmatprep.subr.mxu0 0.0
    %660 = vmatpush1.msra.mxu0 0.0
    %661 = vmatprep.subr.mxu0 0.0
    %662 = vmatpush1.msra.mxu0 0.0
    %663 = vmatprep.subr.mxu0 0.0
    %664 = vmatpush1.msra.mxu0 0.0
    %665 = vmatprep.subr.mxu0 0.0
    %666 = vmatpush1.msra.mxu0 0.0
    %667 = vmatprep.subr.mxu0 0.0
    %668 = vmatpush1.msra.mxu0 0.0
    %669 = vmatprep.subr.mxu0 0.0
    %670 = vmatpush1.msra.mxu0 0.0
    %671 = vmatprep.subr.mxu0 0.0
    %672 = vmatpush1.msra.mxu0 0.0
    %673 = vmatprep.subr.mxu0 0.0
    %674 = vmatpush1.msra.mxu0 0.0
    %675 = vmatprep.subr.mxu0 0.0
    %676 = vmatpush1.msra.mxu0 0.0
    %677 = vmatprep.subr.mxu0 0.0
    %678 = vmatpush1.msra.mxu0 0.0
    %679 = vmatprep.subr.mxu0 0.0
    %680 = vmatpush1.msra.mxu0 0.0
    %681 = vmatprep.subr.mxu0 0.0
    %682 = vmatpush1.msra.mxu0 0.0
    %683 = vmatprep.subr.mxu0 0.0
    %684 = vmatpush1.msra.mxu0 0.0
    %685 = vmatprep.subr.mxu0 0.0
    %686 = vmatpush1.msra.mxu0 0.0
    %687 = vmatprep.mubr.f32.mxu0 0.0
    %688 = vmatmul.mubr.f32.gmra.mrb[0].mxu0 %v621
    %v689 = vpop.f32.mrb[0].mxu0
    %v690 = vadd.f32 0.0, %v689
    %v691 = vpop.f32.mrb[0].mxu0
    %692 = vdwg.mxu0
    %v694 = vrot.slane %v690, 4
    %v696 = vadd.f32 %v165, %v694
    %v697 = vxor.u32 %v696, 2147483648
    %v698 = vmul.f32 %v697, 1.442695
    %v699 = vpow.pop %v698
    %v700 = vadd.f32 %v699, 1.0
    %v701 = vrcp.pop %v700
    %v702 = vmul.f32 1.0, %v701
    %v703 = vtanh.pop %v696
    %v705 = vrot.slane %v604, 7
    %v707 = vmul.f32 %v702, %v705
    %709 = vrot.lane.b32.xlu0 %v703, 64
    %v710 = vpop.permute.xlu0 %709
    %v712 = vmul.f32 %v702, %v710
    %714 = vrot.lane.b32.xlu0 %v712, 32
    %v715 = vpop.permute.xlu0 %714
    %v717 = vadd.f32 %v707, %v715
    %v718 = vtanh.pop %v717
    %720 = vrot.lane.b32.xlu0 %v718, 64
    %v721 = vpop.permute.xlu0 %720
    %v723 = vmul.f32 %v702, %v721
    %vm724 = vcmp.eq.s32.totalorder %v173, 4
    %v725 = vlaneseq
    %v726 = vshrl.u32 %v725, 7
    %v727 = vsub.s32 4, %v726
    %v728 = vrot.slane %v723, %v727
    %v729 = vsel %vm724, %v728, %v616
    %v731 = vrot.slane %v723, 4
    %732 = vrot.lane.b32.xlu0 %v731, 32
    %v733 = vpop.permute.xlu0 %732
    %v734 = vsel %vm174, %v733, 0
    %736 = vmatprep.subr.mxu0 0.0
    %737 = vmatpush1.msra.mxu0 %v168
    %738 = vmatprep.subr.mxu0 0.0
    %739 = vmatpush1.msra.mxu0 %v169
    %740 = vmatprep.subr.mxu0 0.0
    %741 = vmatpush1.msra.mxu0 %v170
    %742 = vmatprep.subr.mxu0 0.0
    %743 = vmatpush1.msra.mxu0 %v171
    %744 = vmatprep.subr.mxu0 0.0
    %745 = vmatpush1.msra.mxu0 0.0
    %746 = vmatprep.subr.mxu0 0.0
    %747 = vmatpush1.msra.mxu0 0.0
    %748 = vmatprep.subr.mxu0 0.0
    %749 = vmatpush1.msra.mxu0 0.0
    %750 = vmatprep.subr.mxu0 0.0
    %751 = vmatpush1.msra.mxu0 0.0
    %752 = vmatprep.subr.mxu0 0.0
    %753 = vmatpush1.msra.mxu0 0.0
    %754 = vmatprep.subr.mxu0 0.0
    %755 = vmatpush1.msra.mxu0 0.0
    %756 = vmatprep.subr.mxu0 0.0
    %757 = vmatpush1.msra.mxu0 0.0
    %758 = vmatprep.subr.mxu0 0.0
    %759 = vmatpush1.msra.mxu0 0.0
    %760 = vmatprep.subr.mxu0 0.0
    %761 = vmatpush1.msra.mxu0 0.0
    %762 = vmatprep.subr.mxu0 0.0
    %763 = vmatpush1.msra.mxu0 0.0
    %764 = vmatprep.subr.mxu0 0.0
    %765 = vmatpush1.msra.mxu0 0.0
    %766 = vmatprep.subr.mxu0 0.0
    %767 = vmatpush1.msra.mxu0 0.0
    %768 = vmatprep.subr.mxu0 0.0
    %769 = vmatpush1.msra.mxu0 0.0
    %770 = vmatprep.subr.mxu0 0.0
    %771 = vmatpush1.msra.mxu0 0.0
    %772 = vmatprep.subr.mxu0 0.0
    %773 = vmatpush1.msra.mxu0 0.0
    %774 = vmatprep.subr.mxu0 0.0
    %775 = vmatpush1.msra.mxu0 0.0
    %776 = vmatprep.subr.mxu0 0.0
    %777 = vmatpush1.msra.mxu0 0.0
    %778 = vmatprep.subr.mxu0 0.0
    %779 = vmatpush1.msra.mxu0 0.0
    %780 = vmatprep.subr.mxu0 0.0
    %781 = vmatpush1.msra.mxu0 0.0
    %782 = vmatprep.subr.mxu0 0.0
    %783 = vmatpush1.msra.mxu0 0.0
    %784 = vmatprep.subr.mxu0 0.0
    %785 = vmatpush1.msra.mxu0 0.0
    %786 = vmatprep.subr.mxu0 0.0
    %787 = vmatpush1.msra.mxu0 0.0
    %788 = vmatprep.subr.mxu0 0.0
    %789 = vmatpush1.msra.mxu0 0.0
    %790 = vmatprep.subr.mxu0 0.0
    %791 = vmatpush1.msra.mxu0 0.0
    %792 = vmatprep.subr.mxu0 0.0
    %793 = vmatpush1.msra.mxu0 0.0
    %794 = vmatprep.subr.mxu0 0.0
    %795 = vmatpush1.msra.mxu0 0.0
    %796 = vmatprep.subr.mxu0 0.0
    %797 = vmatpush1.msra.mxu0 0.0
    %798 = vmatprep.subr.mxu0 0.0
    %799 = vmatpush1.msra.mxu0 0.0
    %800 = vmatprep.mubr.f32.mxu0 0.0
    %801 = vmatmul.mubr.f32.gmra.mrb[0].mxu0 %v734
    %v802 = vpop.f32.mrb[0].mxu0
    %v803 = vadd.f32 0.0, %v802
    %v804 = vpop.f32.mrb[0].mxu0
    %805 = vdwg.mxu0
    %v807 = vrot.slane %v803, 3
    %v809 = vadd.f32 %v165, %v807
    %v810 = vxor.u32 %v809, 2147483648
    %v811 = vmul.f32 %v810, 1.442695
    %v812 = vpow.pop %v811
    %v813 = vadd.f32 %v812, 1.0
    %v814 = vrcp.pop %v813
    %v815 = vmul.f32 1.0, %v814
    %v816 = vtanh.pop %v809
    %v818 = vrot.slane %v717, 7
    %v820 = vmul.f32 %v815, %v818
    %822 = vrot.lane.b32.xlu0 %v816, 64
    %v823 = vpop.permute.xlu0 %822
    %v825 = vmul.f32 %v815, %v823
    %827 = vrot.lane.b32.xlu0 %v825, 32
    %v828 = vpop.permute.xlu0 %827
    %v830 = vadd.f32 %v820, %v828
    %v831 = vtanh.pop %v830
    %833 = vrot.lane.b32.xlu0 %v831, 64
    %v834 = vpop.permute.xlu0 %833
    %v836 = vmul.f32 %v815, %v834
    %vm837 = vcmp.eq.s32.totalorder %v173, 5
    %v838 = vlaneseq
    %v839 = vshrl.u32 %v838, 7
    %v840 = vsub.s32 5, %v839
    %v841 = vrot.slane %v836, %v840
    %v842 = vsel %vm837, %v841, %v729
    %v844 = vrot.slane %v836, 5
    %845 = vrot.lane.b32.xlu0 %v844, 32
    %v846 = vpop.permute.xlu0 %845
    %v847 = vsel %vm174, %v846, 0
    %849 = vmatprep.subr.mxu0 0.0
    %850 = vmatpush1.msra.mxu0 %v168
    %851 = vmatprep.subr.mxu0 0.0
    %852 = vmatpush1.msra.mxu0 %v169
    %853 = vmatprep.subr.mxu0 0.0
    %854 = vmatpush1.msra.mxu0 %v170
    %855 = vmatprep.subr.mxu0 0.0
    %856 = vmatpush1.msra.mxu0 %v171
    %857 = vmatprep.subr.mxu0 0.0
    %858 = vmatpush1.msra.mxu0 0.0
    %859 = vmatprep.subr.mxu0 0.0
    %860 = vmatpush1.msra.mxu0 0.0
    %861 = vmatprep.subr.mxu0 0.0
    %862 = vmatpush1.msra.mxu0 0.0
    %863 = vmatprep.subr.mxu0 0.0
    %864 = vmatpush1.msra.mxu0 0.0
    %865 = vmatprep.subr.mxu0 0.0
    %866 = vmatpush1.msra.mxu0 0.0
    %867 = vmatprep.subr.mxu0 0.0
    %868 = vmatpush1.msra.mxu0 0.0
    %869 = vmatprep.subr.mxu0 0.0
    %870 = vmatpush1.msra.mxu0 0.0
    %871 = vmatprep.subr.mxu0 0.0
    %872 = vmatpush1.msra.mxu0 0.0
    %873 = vmatprep.subr.mxu0 0.0
    %874 = vmatpush1.msra.mxu0 0.0
    %875 = vmatprep.subr.mxu0 0.0
    %876 = vmatpush1.msra.mxu0 0.0
    %877 = vmatprep.subr.mxu0 0.0
    %878 = vmatpush1.msra.mxu0 0.0
    %879 = vmatprep.subr.mxu0 0.0
    %880 = vmatpush1.msra.mxu0 0.0
    %881 = vmatprep.subr.mxu0 0.0
    %882 = vmatpush1.msra.mxu0 0.0
    %883 = vmatprep.subr.mxu0 0.0
    %884 = vmatpush1.msra.mxu0 0.0
    %885 = vmatprep.subr.mxu0 0.0
    %886 = vmatpush1.msra.mxu0 0.0
    %887 = vmatprep.subr.mxu0 0.0
    %888 = vmatpush1.msra.mxu0 0.0
    %889 = vmatprep.subr.mxu0 0.0
    %890 = vmatpush1.msra.mxu0 0.0
    %891 = vmatprep.subr.mxu0 0.0
    %892 = vmatpush1.msra.mxu0 0.0
    %893 = vmatprep.subr.mxu0 0.0
    %894 = vmatpush1.msra.mxu0 0.0
    %895 = vmatprep.subr.mxu0 0.0
    %896 = vmatpush1.msra.mxu0 0.0
    %897 = vmatprep.subr.mxu0 0.0
    %898 = vmatpush1.msra.mxu0 0.0
    %899 = vmatprep.subr.mxu0 0.0
    %900 = vmatpush1.msra.mxu0 0.0
    %901 = vmatprep.subr.mxu0 0.0
    %902 = vmatpush1.msra.mxu0 0.0
    %903 = vmatprep.subr.mxu0 0.0
    %904 = vmatpush1.msra.mxu0 0.0
    %905 = vmatprep.subr.mxu0 0.0
    %906 = vmatpush1.msra.mxu0 0.0
    %907 = vmatprep.subr.mxu0 0.0
    %908 = vmatpush1.msra.mxu0 0.0
    %909 = vmatprep.subr.mxu0 0.0
    %910 = vmatpush1.msra.mxu0 0.0
    %911 = vmatprep.subr.mxu0 0.0
    %912 = vmatpush1.msra.mxu0 0.0
    %913 = vmatprep.mubr.f32.mxu0 0.0
    %914 = vmatmul.mubr.f32.gmra.mrb[0].mxu0 %v847
    %v915 = vpop.f32.mrb[0].mxu0
    %v916 = vadd.f32 0.0, %v915
    %v917 = vpop.f32.mrb[0].mxu0
    %918 = vdwg.mxu0
    %v920 = vrot.slane %v916, 2
    %v922 = vadd.f32 %v165, %v920
    %v923 = vxor.u32 %v922, 2147483648
    %v924 = vmul.f32 %v923, 1.442695
    %v925 = vpow.pop %v924
    %v926 = vadd.f32 %v925, 1.0
    %v927 = vrcp.pop %v926
    %v928 = vmul.f32 1.0, %v927
    %v929 = vtanh.pop %v922
    %v931 = vrot.slane %v830, 7
    %v933 = vmul.f32 %v928, %v931
    %935 = vrot.lane.b32.xlu0 %v929, 64
    %v936 = vpop.permute.xlu0 %935
    %v938 = vmul.f32 %v928, %v936
    %940 = vrot.lane.b32.xlu0 %v938, 32
    %v941 = vpop.permute.xlu0 %940
    %v943 = vadd.f32 %v933, %v941
    %v944 = vtanh.pop %v943
    %946 = vrot.lane.b32.xlu0 %v944, 64
    %v947 = vpop.permute.xlu0 %946
    %v949 = vmul.f32 %v928, %v947
    %vm950 = vcmp.eq.s32.totalorder %v173, 6
    %v951 = vlaneseq
    %v952 = vshrl.u32 %v951, 7
    %v953 = vsub.s32 6, %v952
    %v954 = vrot.slane %v949, %v953
    %v955 = vsel %vm950, %v954, %v842
    %v957 = vrot.slane %v949, 6
    %958 = vrot.lane.b32.xlu0 %v957, 32
    %v959 = vpop.permute.xlu0 %958
    %v960 = vsel %vm174, %v959, 0
    %962 = vmatprep.subr.mxu0 0.0
    %963 = vmatpush1.msra.mxu0 %v168
    %964 = vmatprep.subr.mxu0 0.0
    %965 = vmatpush1.msra.mxu0 %v169
    %966 = vmatprep.subr.mxu0 0.0
    %967 = vmatpush1.msra.mxu0 %v170
    %968 = vmatprep.subr.mxu0 0.0
    %969 = vmatpush1.msra.mxu0 %v171
    %970 = vmatprep.subr.mxu0 0.0
    %971 = vmatpush1.msra.mxu0 0.0
    %972 = vmatprep.subr.mxu0 0.0
    %973 = vmatpush1.msra.mxu0 0.0
    %974 = vmatprep.subr.mxu0 0.0
    %975 = vmatpush1.msra.mxu0 0.0
    %976 = vmatprep.subr.mxu0 0.0
    %977 = vmatpush1.msra.mxu0 0.0
    %978 = vmatprep.subr.mxu0 0.0
    %979 = vmatpush1.msra.mxu0 0.0
    %980 = vmatprep.subr.mxu0 0.0
    %981 = vmatpush1.msra.mxu0 0.0
    %982 = vmatprep.subr.mxu0 0.0
    %983 = vmatpush1.msra.mxu0 0.0
    %984 = vmatprep.subr.mxu0 0.0
    %985 = vmatpush1.msra.mxu0 0.0
    %986 = vmatprep.subr.mxu0 0.0
    %987 = vmatpush1.msra.mxu0 0.0
    %988 = vmatprep.subr.mxu0 0.0
    %989 = vmatpush1.msra.mxu0 0.0
    %990 = vmatprep.subr.mxu0 0.0
    %991 = vmatpush1.msra.mxu0 0.0
    %992 = vmatprep.subr.mxu0 0.0
    %993 = vmatpush1.msra.mxu0 0.0
    %994 = vmatprep.subr.mxu0 0.0
    %995 = vmatpush1.msra.mxu0 0.0
    %996 = vmatprep.subr.mxu0 0.0
    %997 = vmatpush1.msra.mxu0 0.0
    %998 = vmatprep.subr.mxu0 0.0
    %999 = vmatpush1.msra.mxu0 0.0
    %1000 = vmatprep.subr.mxu0 0.0
    %1001 = vmatpush1.msra.mxu0 0.0
    %1002 = vmatprep.subr.mxu0 0.0
    %1003 = vmatpush1.msra.mxu0 0.0
    %1004 = vmatprep.subr.mxu0 0.0
    %1005 = vmatpush1.msra.mxu0 0.0
    %1006 = vmatprep.subr.mxu0 0.0
    %1007 = vmatpush1.msra.mxu0 0.0
    %1008 = vmatprep.subr.mxu0 0.0
    %1009 = vmatpush1.msra.mxu0 0.0
    %1010 = vmatprep.subr.mxu0 0.0
    %1011 = vmatpush1.msra.mxu0 0.0
    %1012 = vmatprep.subr.mxu0 0.0
    %1013 = vmatpush1.msra.mxu0 0.0
    %1014 = vmatprep.subr.mxu0 0.0
    %1015 = vmatpush1.msra.mxu0 0.0
    %1016 = vmatprep.subr.mxu0 0.0
    %1017 = vmatpush1.msra.mxu0 0.0
    %1018 = vmatprep.subr.mxu0 0.0
    %1019 = vmatpush1.msra.mxu0 0.0
    %1020 = vmatprep.subr.mxu0 0.0
    %1021 = vmatpush1.msra.mxu0 0.0
    %1022 = vmatprep.subr.mxu0 0.0
    %1023 = vmatpush1.msra.mxu0 0.0
    %1024 = vmatprep.subr.mxu0 0.0
    %1025 = vmatpush1.msra.mxu0 0.0
    %1026 = vmatprep.mubr.f32.mxu0 0.0
    %1027 = vmatmul.mubr.f32.gmra.mrb[0].mxu0 %v960
    %v1028 = vpop.f32.mrb[0].mxu0
    %v1029 = vadd.f32 0.0, %v1028
    %v1030 = vpop.f32.mrb[0].mxu0
    %1031 = vdwg.mxu0
    %v1033 = vrot.slane %v1029, 1
    %v1035 = vadd.f32 %v165, %v1033
    %v1036 = vxor.u32 %v1035, 2147483648
    %v1037 = vmul.f32 %v1036, 1.442695
    %v1038 = vpow.pop %v1037
    %v1039 = vadd.f32 %v1038, 1.0
    %v1040 = vrcp.pop %v1039
    %v1041 = vmul.f32 1.0, %v1040
    %v1042 = vtanh.pop %v1035
    %v1044 = vrot.slane %v943, 7
    %v1046 = vmul.f32 %v1041, %v1044
    %1048 = vrot.lane.b32.xlu0 %v1042, 64
    %v1049 = vpop.permute.xlu0 %1048
    %v1051 = vmul.f32 %v1041, %v1049
    %1053 = vrot.lane.b32.xlu0 %v1051, 32
    %v1054 = vpop.permute.xlu0 %1053
    %v1056 = vadd.f32 %v1046, %v1054
    %v1057 = vtanh.pop %v1056
    %1059 = vrot.lane.b32.xlu0 %v1057, 64
    %v1060 = vpop.permute.xlu0 %1059
    %v1062 = vmul.f32 %v1041, %v1060
    %vm1063 = vcmp.eq.s32.totalorder %v173, 7
    %v1064 = vlaneseq
    %v1065 = vshrl.u32 %v1064, 7
    %v1066 = vsub.s32 7, %v1065
    %v1067 = vrot.slane %v1062, %v1066
    %v1068 = vsel %vm1063, %v1067, %v955
    %v1069 = vld [vmem:[#allocation8] sm:$0xff]
    %v1070 = vld [vmem:[#allocation8 + $0x8] sm:$0xff]
    %v1071 = vld [vmem:[#allocation8 + $0x10] sm:$0xff]
    %v1072 = vld [vmem:[#allocation8 + $0x18] sm:$0xff]
    %v1073 = vld [vmem:[%s5] sm:$0x1]
    %v1075 = vlaneseq
    %v1076 = vshrl.u32 %v1075, 7
    %v1077 = vsub.s32 0, %v1076
    %v1078 = vrot.slane %v1073, %v1077
    %1081 = vrot.lane.b32.xlu0 %v1068, 32
    %v1082 = vpop.permute.xlu0 %1081
    %v1083 = vsel %vm174, %v1082, 0
    %1085 = vmatprep.subr.mxu0 0.0
    %1086 = vmatpush1.msra.mxu0 %v1069
    %1087 = vmatprep.subr.mxu0 0.0
    %1088 = vmatpush1.msra.mxu0 %v1070
    %1089 = vmatprep.subr.mxu0 0.0
    %1090 = vmatpush1.msra.mxu0 %v1071
    %1091 = vmatprep.subr.mxu0 0.0
    %1092 = vmatpush1.msra.mxu0 %v1072
    %1093 = vmatprep.subr.mxu0 0.0
    %1094 = vmatpush1.msra.mxu0 0.0
    %1095 = vmatprep.subr.mxu0 0.0
    %1096 = vmatpush1.msra.mxu0 0.0
    %1097 = vmatprep.subr.mxu0 0.0
    %1098 = vmatpush1.msra.mxu0 0.0
    %1099 = vmatprep.subr.mxu0 0.0
    %1100 = vmatpush1.msra.mxu0 0.0
    %1101 = vmatprep.subr.mxu0 0.0
    %1102 = vmatpush1.msra.mxu0 0.0
    %1103 = vmatprep.subr.mxu0 0.0
    %1104 = vmatpush1.msra.mxu0 0.0
    %1105 = vmatprep.subr.mxu0 0.0
    %1106 = vmatpush1.msra.mxu0 0.0
    %1107 = vmatprep.subr.mxu0 0.0
    %1108 = vmatpush1.msra.mxu0 0.0
    %1109 = vmatprep.subr.mxu0 0.0
    %1110 = vmatpush1.msra.mxu0 0.0
    %1111 = vmatprep.subr.mxu0 0.0
    %1112 = vmatpush1.msra.mxu0 0.0
    %1113 = vmatprep.subr.mxu0 0.0
    %1114 = vmatpush1.msra.mxu0 0.0
    %1115 = vmatprep.subr.mxu0 0.0
    %1116 = vmatpush1.msra.mxu0 0.0
    %1117 = vmatprep.subr.mxu0 0.0
    %1118 = vmatpush1.msra.mxu0 0.0
    %1119 = vmatprep.subr.mxu0 0.0
    %1120 = vmatpush1.msra.mxu0 0.0
    %1121 = vmatprep.subr.mxu0 0.0
    %1122 = vmatpush1.msra.mxu0 0.0
    %1123 = vmatprep.subr.mxu0 0.0
    %1124 = vmatpush1.msra.mxu0 0.0
    %1125 = vmatprep.subr.mxu0 0.0
    %1126 = vmatpush1.msra.mxu0 0.0
    %1127 = vmatprep.subr.mxu0 0.0
    %1128 = vmatpush1.msra.mxu0 0.0
    %1129 = vmatprep.subr.mxu0 0.0
    %1130 = vmatpush1.msra.mxu0 0.0
    %1131 = vmatprep.subr.mxu0 0.0
    %1132 = vmatpush1.msra.mxu0 0.0
    %1133 = vmatprep.subr.mxu0 0.0
    %1134 = vmatpush1.msra.mxu0 0.0
    %1135 = vmatprep.subr.mxu0 0.0
    %1136 = vmatpush1.msra.mxu0 0.0
    %1137 = vmatprep.subr.mxu0 0.0
    %1138 = vmatpush1.msra.mxu0 0.0
    %1139 = vmatprep.subr.mxu0 0.0
    %1140 = vmatpush1.msra.mxu0 0.0
    %1141 = vmatprep.subr.mxu0 0.0
    %1142 = vmatpush1.msra.mxu0 0.0
    %1143 = vmatprep.subr.mxu0 0.0
    %1144 = vmatpush1.msra.mxu0 0.0
    %1145 = vmatprep.subr.mxu0 0.0
    %1146 = vmatpush1.msra.mxu0 0.0
    %1147 = vmatprep.subr.mxu0 0.0
    %1148 = vmatpush1.msra.mxu0 0.0
    %1149 = vmatprep.mubr.f32.mxu0 0.0
    %1150 = vmatmul.mubr.f32.gmra.mrb[0].mxu0 %v1083
    %v1151 = vpop.f32.mrb[0].mxu0
    %v1152 = vadd.f32 %v1078, %v1151
    %v1153 = vpop.f32.mrb[0].mxu0
    %1154 = vdwg.mxu0
    %v1155 = vmax.f32 %v1152, 0.0
    %v1156 = vld [vmem:[%s6] sm:$0x1]
    %v1158 = vlaneseq
    %v1159 = vshrl.u32 %v1158, 7
    %v1160 = vsub.s32 0, %v1159
    %v1161 = vrot.slane %v1156, %v1160
    %v1163 = vadd.f32 %v1155, %v1161
    %1164 = vmax.xlane.f32.xlu0 %v1163
    %v1165 = vpop.xlane.xlu0 %1164
    %v1166 = vsub.f32 %v1163, %v1165
    %v1167 = vmul.f32 %v1166, 1.442695
    %v1168 = vpow.pop %v1167
    %1169 = vadd.xlane.f32.xlu0 %v1168
    %v1170 = vpop.xlane.xlu0 %1169
    %v1171 = vlog2.pop %v1170
    %v1172 = vmul.f32 %v1171, 0.6931472
    %v1173 = vsub.f32 %v1166, %v1172
    %1174 = vst [vmem:[#allocation10] sm:$0xff] %v1173
    %1176 = vrot.lane.b32.xlu0 %v1062, 32
    %v1177 = vpop.permute.xlu0 %1176
    %vm1179 = vcmask 261127
    %1180 = vst.msk [vmem:[#allocation11 - $0x7] sm:$0x80] %vm1179, %v1177
    %1182 = vrot.lane.b32.xlu0 %v1056, 96
    %v1183 = vpop.permute.xlu0 %1182
    %1185 = vst.msk [vmem:[#allocation13 - $0x7] sm:$0x80] %vm1179, %v1183
    // Predicated region
    $region46: #{tpu_custom_call.1} parent=1 // pred_check
      _
    $region47: #{tpu_custom_call.1} parent=1 // pred_check_branch
      %1187 = sbr.rel (0) target = $region49
    $region48: #{tpu_custom_call.1} parent=1 // pred_region
      %s1189 = ssub.s32 128, 128
      %1190 = vsyncadd [#allocation4], %s1189
      %s1192 = sshll.u32 [#allocation10], 4
      %s1193 = int_to_ptr.vmem [resolvable:$true] %s1192
      %1195 = dma.vmem_to_hbm [thread:$0]  %s1193, 128, %s7, [#allocation4]
    $region49: #{tpu_custom_call.1} parent=1 // pred_fallthru
      _
    // Predicated region
    $region50: #{tpu_custom_call.1} parent=1 // pred_check
      _
    $region51: #{tpu_custom_call.1} parent=1 // pred_check_branch
      %1197 = sbr.rel (0) target = $region53
    $region52: #{tpu_custom_call.1} parent=1 // pred_region
      %s1199 = ssub.s32 16, 16
      %1200 = vsyncadd [#allocation12], %s1199
      %s1202 = sshll.u32 [#allocation11], 4
      %s1203 = int_to_ptr.vmem [resolvable:$true] %s1202
      %1205 = dma.vmem_to_hbm [thread:$0]  %s1203, 16, %s8, [#allocation12]
    $region53: #{tpu_custom_call.1} parent=1 // pred_fallthru
      _
    // Predicated region
    $region54: #{tpu_custom_call.1} parent=1 // pred_check
      _
    $region55: #{tpu_custom_call.1} parent=1 // pred_check_branch
      %1207 = sbr.rel (0) target = $region57
    $region56: #{tpu_custom_call.1} parent=1 // pred_region
      %s1209 = ssub.s32 16, 16
      %1210 = vsyncadd [#allocation12], %s1209
      %s1212 = sshll.u32 [#allocation13], 4
      %s1213 = int_to_ptr.vmem [resolvable:$true] %s1212
      %1215 = dma.vmem_to_hbm [thread:$0]  %s1213, 16, %s9, [#allocation12]
    $region57: #{tpu_custom_call.1} parent=1 // pred_fallthru
      _
    // Predicated region
    $region58: #{tpu_custom_call.1} parent=1 // pred_check
      _
    $region59: #{tpu_custom_call.1} parent=1 // pred_check_branch
      %1217 = sbr.rel (0) target = $region61
    $region60: #{tpu_custom_call.1} parent=1 // pred_region
      %1218 = dma.done [#allocation4], 128
    $region61: #{tpu_custom_call.1} parent=1 // pred_fallthru
      _
    // Predicated region
    $region62: #{tpu_custom_call.1} parent=1 // pred_check
      _
    $region63: #{tpu_custom_call.1} parent=1 // pred_check_branch
      %1220 = sbr.rel (0) target = $region65
    $region64: #{tpu_custom_call.1} parent=1 // pred_region
      %1221 = dma.done [#allocation12], 16
    $region65: #{tpu_custom_call.1} parent=1 // pred_fallthru
      _
    // Predicated region
    $region66: #{tpu_custom_call.1} parent=1 // pred_check
      _
    $region67: #{tpu_custom_call.1} parent=1 // pred_check_branch
      %1223 = sbr.rel (0) target = $region69
    $region68: #{tpu_custom_call.1} parent=1 // pred_region
      %1224 = dma.done [#allocation12], 16
    $region69: #{tpu_custom_call.1} parent=1 // pred_fallthru
      _
    %1225 = vsyncpa [#allocation3], 1
    %1226 = vsyncpa [#allocation6], 1
    %1227 = vsyncpa [#allocation9], 1
    %1228 = vsyncpa [#allocation4], 1
    %1229 = vsyncpa [#allocation12], 1

</llo_original>
